<compile_context>
chip_gen: v7x
topology: tpu7x:2x2x1
jax: 0.10.0
libtpu: 0.0.40
codegen_flags: <defaults>
</compile_context>

<pallas_src>
import functools

import jax
import jax.numpy as jnp
from jax.experimental import pallas as pl
from jax.experimental.pallas import tpu as pltpu


def _round_up(x, m):
    return (x + m - 1) // m * m


def _sage_layer_kernel(ids_ref, cnt_ref, a_ref, xk_ref, xi_ref, ws_ref, wn_ref,
                       b_ref, o_ref, acc_ref, *, apply_relu, max_blocks, tk,
                       x_resident):
    """One SAGEConv('mean') layer at grid point (row-tile i, nonzero-block k).

    ids_ref : [n_i * max_blocks] int32 (SMEM)  per-row-tile nonzero k-block ids
    cnt_ref : [n_i]              int32 (SMEM)  number of nonzero k-blocks
    a_ref   : [tm, tk]      row-normalized adjacency tile (compute dtype)
    xk_ref  : [n_p, Fp] (resident) or [tk, Fp] (streamed) neighbor features
    xi_ref  : [tm, Fp]      self-feature rows for this row tile
    ws_ref  : [Fp, Hp]      W_self   (VMEM-resident)
    wn_ref  : [Fp, Hp]      W_neigh  (VMEM-resident)
    b_ref   : [1, Hp]       bias (f32, VMEM-resident)
    o_ref   : [tm, Hp]      output rows
    acc_ref : [tm, Fp] f32  neighbor-mean accumulator (scratch)
    """
    i = pl.program_id(0)
    k = pl.program_id(1)

    @pl.when(k == 0)
    def _init():
        acc_ref[...] = jnp.zeros_like(acc_ref)

    # Accumulate A[i, blk] @ X[blk, :] only for real (nonzero) blocks.
    @pl.when(k < cnt_ref[i])
    def _accumulate():
        if x_resident:
            blk = ids_ref[i * max_blocks + k]
            start = pl.multiple_of(blk * tk, 128)
            xk = xk_ref[pl.ds(start, tk), :]
        else:
            xk = xk_ref[...]
        acc_ref[...] += jnp.dot(a_ref[...], xk,
                                preferred_element_type=jnp.float32)

    @pl.when(k == pl.num_programs(1) - 1)
    def _finalize():
        neigh = acc_ref[...].astype(xi_ref.dtype)
        out = jnp.dot(xi_ref[...], ws_ref[...],
                      preferred_element_type=jnp.float32)
        out = out + jnp.dot(neigh, wn_ref[...],
                            preferred_element_type=jnp.float32)
        out = out + b_ref[...]
        if apply_relu:
            out = jnp.maximum(out, 0.0)
        o_ref[...] = out.astype(o_ref.dtype)


def sage_conv(a_mean, x, w_self, w_neigh, bias, block_ids, block_cnt,
              max_blocks, *, apply_relu, tm, tk, out_dtype):
    """One SAGEConv('mean') layer. Inputs already padded / cast."""
    n_p = a_mean.shape[0]
    f_p = x.shape[1]
    h_p = w_self.shape[1]
    assert n_p % tm == 0 and n_p % tk == 0
    cd = x.dtype
    cd_bytes = jnp.dtype(cd).itemsize

    # Keep neighbor features fully VMEM-resident when small enough; otherwise
    # stream per nonzero block via the scalar-prefetched block list.
    x_resident = (n_p * f_p * cd_bytes) <= (8 << 20)
    if x_resident:
        xk_spec = pl.BlockSpec((n_p, f_p), lambda i, k, ids, cnt: (0, 0))
        xk_bytes = 2 * n_p * f_p * cd_bytes
    else:
        xk_spec = pl.BlockSpec(
            (tk, f_p), lambda i, k, ids, cnt: (ids[i * max_blocks + k], 0))
        xk_bytes = 2 * tk * f_p * cd_bytes

    est = (2 * tm * tk * cd_bytes                     # A tiles (dbl-buffered)
           + xk_bytes                                 # neighbor features
           + 2 * tm * f_p * cd_bytes                  # self-feature tiles
           + 2 * w_self.size * cd_bytes               # W_self  (dbl-buffered)
           + 2 * w_neigh.size * cd_bytes              # W_neigh (dbl-buffered)
           + 2 * h_p * 4                              # bias
           + 2 * tm * h_p * jnp.dtype(out_dtype).itemsize   # output tiles
           + tm * f_p * 4)                            # f32 accumulator scratch

    try:
        vmem_cap = int(pltpu.get_tpu_info().vmem_capacity_bytes)
    except Exception:
        vmem_cap = 64 << 20                           # conservative (v7x/core)
    vmem_limit = int(min(max(int(1.5 * est), 16 << 20), int(0.75 * vmem_cap)))

    kernel = functools.partial(_sage_layer_kernel, apply_relu=apply_relu,
                               max_blocks=max_blocks, tk=tk,
                               x_resident=x_resident)

    return pl.pallas_call(
        kernel,
        out_shape=jax.ShapeDtypeStruct((n_p, h_p), out_dtype),
        grid_spec=pltpu.PrefetchScalarGridSpec(
            num_scalar_prefetch=2,
            grid=(n_p // tm, max_blocks),             # reduction axis last
            in_specs=[
                # A tile: data-dependent neighbor block (skips all-zero blocks)
                pl.BlockSpec(
                    (tm, tk),
                    lambda i, k, ids, cnt: (i, ids[i * max_blocks + k])),
                xk_spec,                                             # X neighbor
                pl.BlockSpec((tm, f_p), lambda i, k, ids, cnt: (i, 0)),  # X self
                pl.BlockSpec(w_self.shape, lambda i, k, ids, cnt: (0, 0)),
                pl.BlockSpec(w_neigh.shape, lambda i, k, ids, cnt: (0, 0)),
                pl.BlockSpec((1, h_p), lambda i, k, ids, cnt: (0, 0)),   # bias
            ],
            out_specs=pl.BlockSpec((tm, h_p), lambda i, k, ids, cnt: (i, 0)),
            scratch_shapes=[pltpu.VMEM((tm, f_p), jnp.float32)],
        ),
        compiler_params=pltpu.CompilerParams(
            dimension_semantics=("parallel", "arbitrary"),
            vmem_limit_bytes=vmem_limit,
        ),
    )(block_ids, block_cnt, a_mean, x, x, w_self, w_neigh, bias)


def graphsage_forward(a_mean, x, params, *, tile=1024,
                      compute_dtype=jnp.bfloat16):
    """GraphSAGE.forward: h = relu(conv1(g, x)); h = conv2(g, h).

    Note: not jittable end-to-end (the grid extent `max_blocks` is a static
    host value derived from the adjacency block structure).
    """
    n, fin = x.shape
    h_feats = params["w_self1"].shape[1]
    cd = compute_dtype
    assert tile % 128 == 0

    # --- tile geometry: pow2*128 tiles so lcm(tm, tk) == max(tm, tk) ---------
    n_128 = _round_up(n, 128)

    def _pow2_tile(cap):
        t = 128
        while t * 2 <= cap:
            t *= 2
        return t

    tk = _pow2_tile(min(tile, n_128))
    tm = _pow2_tile(min(tile, n_128))
    if n_128 >= 256:
        # >= 2 row tiles so the "parallel" axis can split across v7x TensorCores
        tm = min(tm, _pow2_tile(min(tile, max(n_128 // 2, 128))))
    n_p = _round_up(n, max(tm, tk))
    f_p = _round_up(fin, 128)
    h_p = _round_up(h_feats, 128)

    # --- padded inputs: single pad pass fused with the f32 -> bf16 cast ------
    a_p = jnp.pad(a_mean.astype(cd), ((0, n_p - n), (0, n_p - n)))
    x_p = jnp.pad(x.astype(cd), ((0, n_p - n), (0, f_p - fin)))

    def pad_w(w, rows, cols):
        return jnp.pad(w.astype(cd),
                       ((0, rows - w.shape[0]), (0, cols - w.shape[1])))

    def pad_b(b, cols):
        return jnp.pad(b.reshape(1, -1).astype(jnp.float32),
                       ((0, 0), (0, cols - b.shape[0])))

    ws1 = pad_w(params["w_self1"], f_p, h_p)
    wn1 = pad_w(params["w_neigh1"], f_p, h_p)
    ws2 = pad_w(params["w_self2"], h_p, h_p)
    wn2 = pad_w(params["w_neigh2"], h_p, h_p)
    b1 = pad_b(params["b1"], h_p)
    b2 = pad_b(params["b2"], h_p)

    # --- block-sparsity structure of A (shared by both layers) ---------------
    n_i, n_k = n_p // tm, n_p // tk
    blk_nnz = (a_p.reshape(n_i, tm, n_k, tk) != 0).any(axis=(1, 3))  # [n_i,n_k]
    counts = blk_nnz.sum(axis=1).astype(jnp.int32)                   # [n_i]
    max_blocks = max(int(jnp.max(counts)), 1)
    order = jnp.argsort(~blk_nnz, axis=1).astype(jnp.int32)   # nonzero ids first
    ids = order[:, :max_blocks]
    last = jnp.take_along_axis(order, jnp.maximum(counts - 1, 0)[:, None],
                               axis=1)
    # Padding entries repeat the last valid block id (same index -> no re-DMA).
    ids = jnp.where(jnp.arange(max_blocks)[None, :] < counts[:, None], ids, last)
    block_ids = ids.reshape(-1).astype(jnp.int32)

    # --- two SAGEConv layers --------------------------------------------------
    h1 = sage_conv(a_p, x_p, ws1, wn1, b1, block_ids, counts, max_blocks,
                   apply_relu=True, tm=tm, tk=tk, out_dtype=cd)
    h2 = sage_conv(a_p, h1, ws2, wn2, b2, block_ids, counts, max_blocks,
                   apply_relu=False, tm=tm, tk=tk, out_dtype=jnp.float32)
    return h2[:n, :h_feats]


def _reference(a_mean, x, params, compute_dtype=jnp.bfloat16):
    """Pure-JAX reference mirroring the kernel's dtype path (bf16 in, f32 acc)."""
    cd = compute_dtype
    f32 = jnp.float32
    hi = jax.lax.Precision.HIGHEST

    def mm(a, b):
        return jnp.dot(a.astype(cd).astype(f32), b.astype(cd).astype(f32),
                       precision=hi)

    neigh1 = mm(a_mean, x)
    h = mm(x, params["w_self1"]) + mm(neigh1, params["w_neigh1"]) + params["b1"]
    h = jnp.maximum(h, 0.0)
    h = h.astype(cd).astype(f32)          # layer-1 activations stored as bf16
    neigh2 = mm(a_mean, h)
    out = (mm(h, params["w_self2"]) + mm(neigh2, params["w_neigh2"])
           + params["b2"])
    return out


if __name__ == "__main__":
    key = jax.random.PRNGKey(0)
    n_nodes = 300
    in_feats = 48
    h_feats = 96

    k_adj, k_x, k1, k2, k3, k4 = jax.random.split(key, 6)

    # Deterministic banded random graph (~30% density within +-40 hops, no
    # self loops) -> exercises the block-sparse skip path and the multi-tile
    # grid while staying small.
    idx = jnp.arange(n_nodes)
    band = (jnp.abs(idx[:, None] - idx[None, :]) <= 40)
    adj = ((jax.random.uniform(k_adj, (n_nodes, n_nodes)) < 0.3) & band)
    adj = adj.astype(jnp.float32) * (1.0 - jnp.eye(n_nodes, dtype=jnp.float32))
    deg = jnp.sum(adj, axis=1, keepdims=True)
    a_mean = adj / jnp.maximum(deg, 1.0)   # row-normalized -> mean over neighbors

    x = jax.random.normal(k_x, (n_nodes, in_feats), dtype=jnp.float32)

    params = {
        "w_self1": jax.random.normal(k1, (in_feats, h_feats), jnp.float32)
        * (1.0 / jnp.sqrt(in_feats)),
        "w_neigh1": jax.random.normal(k2, (in_feats, h_feats), jnp.float32)
        * (1.0 / jnp.sqrt(in_feats)),
        "b1": jnp.zeros((h_feats,), jnp.float32),
        "w_self2": jax.random.normal(k3, (h_feats, h_feats), jnp.float32)
        * (1.0 / jnp.sqrt(h_feats)),
        "w_neigh2": jax.random.normal(k4, (h_feats, h_feats), jnp.float32)
        * (1.0 / jnp.sqrt(h_feats)),
        "b2": jnp.zeros((h_feats,), jnp.float32),
    }

    out = graphsage_forward(a_mean, x, params)
    out = jax.block_until_ready(out)

    ref = _reference(a_mean, x, params)
    assert out.shape == (n_nodes, h_feats)
    # bf16 storage of A / activations in both paths -> loose tolerance.
    assert jnp.allclose(out, ref, atol=2e-2, rtol=2e-2), (
        float(jnp.max(jnp.abs(out - ref))))

    print("KERNEL_OK")
</pallas_src>

<mosaic_0001>
module attributes {stable_mosaic.version = 11 : i64} {
  func.func @_sage_layer_kernel(%arg0: i32, %arg1: i32, %arg2: memref<8xi32, #tpu.memory_space<smem>>, %arg3: memref<4xi32, #tpu.memory_space<smem>>, %arg4: memref<128x256xbf16, #tpu.memory_space<vmem>>, %arg5: memref<512x128xbf16, #tpu.memory_space<vmem>>, %arg6: memref<128x128xbf16, #tpu.memory_space<vmem>>, %arg7: memref<128x128xbf16, #tpu.memory_space<vmem>>, %arg8: memref<128x128xbf16, #tpu.memory_space<vmem>>, %arg9: memref<1x128xf32, #tpu.memory_space<vmem>>, %arg10: memref<128x128xbf16, #tpu.memory_space<vmem>>, %arg11: memref<128x128xf32, #tpu.memory_space<vmem>>) attributes {dimension_semantics = [#tpu.dimension_semantics<parallel>, #tpu.dimension_semantics<arbitrary>], iteration_bounds = array<i64: 4, 2>, scalar_prefetch = 2 : i64, scratch_operands = 1 : i64, tpu.core_type = #tpu.core_type<tc>, window_params = [{transform_indices = @transform_0, window_bounds = array<i64: 128, 256>}, {pipeline_mode = #tpu.pipeline_mode<synchronous>, transform_indices = @transform_1, window_bounds = array<i64: 512, 128>}, {transform_indices = @transform_2, window_bounds = array<i64: 128, 128>}, {pipeline_mode = #tpu.pipeline_mode<synchronous>, transform_indices = @transform_3, window_bounds = array<i64: 128, 128>}, {pipeline_mode = #tpu.pipeline_mode<synchronous>, transform_indices = @transform_4, window_bounds = array<i64: 128, 128>}, {pipeline_mode = #tpu.pipeline_mode<synchronous>, transform_indices = @transform_5, window_bounds = array<i64: 1, 128>}, {transform_indices = @transform_6, window_bounds = array<i64: 128, 128>}]} {
    %c0_i32 = arith.constant 0 : i32
    %0 = arith.cmpi eq, %arg1, %c0_i32 : i32
    %1 = arith.extui %0 : i1 to i32
    %c0_i32_0 = arith.constant 0 : i32
    %2 = arith.cmpi ne, %1, %c0_i32_0 : i32
    scf.if %2 {
      %cst = arith.constant 0.000000e+00 : f32
      %11 = vector.broadcast %cst : f32 to vector<128x128xf32>
      %c0 = arith.constant 0 : index
      %c0_3 = arith.constant 0 : index
      %12 = vector.load %arg11[%c0, %c0_3] : memref<128x128xf32, #tpu.memory_space<vmem>>, vector<128x128xf32>
      tpu.vector_store %arg11[%c0, %c0_3], %11 {strides = array<i32>} : memref<128x128xf32, #tpu.memory_space<vmem>>, vector<128x128xf32>,
    } else {
    }
    %3 = arith.index_cast %arg0 : i32 to index
    %4 = memref.load %arg3[%3] : memref<4xi32, #tpu.memory_space<smem>>
    %5 = arith.cmpi slt, %arg1, %4 : i32
    %6 = arith.extui %5 : i1 to i32
    %c0_i32_1 = arith.constant 0 : i32
    %7 = arith.cmpi ne, %6, %c0_i32_1 : i32
    scf.if %7 {
      %c2_i32 = arith.constant 2 : i32
      %11 = arith.muli %arg0, %c2_i32 : i32
      %12 = arith.addi %11, %arg1 : i32
      %13 = arith.index_cast %12 : i32 to index
      %14 = memref.load %arg2[%13] : memref<8xi32, #tpu.memory_space<smem>>
      %c256_i32 = arith.constant 256 : i32
      %15 = arith.muli %14, %c256_i32 : i32
      %16 = tpu.assume_multiple %15, 128 : i32
      %17 = arith.index_cast %16 : i32 to index
      %c0 = arith.constant 0 : index
      %18 = vector.load %arg5[%17, %c0] : memref<512x128xbf16, #tpu.memory_space<vmem>>, vector<256x128xbf16>
      %c0_3 = arith.constant 0 : index
      %c0_4 = arith.constant 0 : index
      %19 = vector.load %arg11[%c0_3, %c0_4] : memref<128x128xf32, #tpu.memory_space<vmem>>, vector<128x128xf32>
      %c0_5 = arith.constant 0 : index
      %c0_6 = arith.constant 0 : index
      %20 = vector.load %arg4[%c0_5, %c0_6] : memref<128x256xbf16, #tpu.memory_space<vmem>>, vector<128x256xbf16>
      %cst = arith.constant dense<0.000000e+00> : vector<128x128xf32>
      %21 = tpu.matmul %20, %18, %cst {dimension_numbers = #tpu.dot_dimension_numbers<[1], [0], [0], [1], [0, 0, 1, 1], [], []>} : vector<128x256xbf16>, vector<256x128xbf16>, vector<128x128xf32> -> vector<128x128xf32>
      %22 = arith.addf %19, %21 : vector<128x128xf32>
      %c0_7 = arith.constant 0 : index
      %c0_8 = arith.constant 0 : index
      %23 = vector.load %arg11[%c0_7, %c0_8] : memref<128x128xf32, #tpu.memory_space<vmem>>, vector<128x128xf32>
      tpu.vector_store %arg11[%c0_7, %c0_8], %22 {strides = array<i32>} : memref<128x128xf32, #tpu.memory_space<vmem>>, vector<128x128xf32>,
    } else {
    }
    %c1_i32 = arith.constant 1 : i32
    %8 = arith.cmpi eq, %arg1, %c1_i32 : i32
    %9 = arith.extui %8 : i1 to i32
    %c0_i32_2 = arith.constant 0 : i32
    %10 = arith.cmpi ne, %9, %c0_i32_2 : i32
    scf.if %10 {
      %c0 = arith.constant 0 : index
      %c0_3 = arith.constant 0 : index
      %11 = vector.load %arg11[%c0, %c0_3] : memref<128x128xf32, #tpu.memory_space<vmem>>, vector<128x128xf32>
      %12 = arith.truncf %11 : vector<128x128xf32> to vector<128x128xbf16>
      %c0_4 = arith.constant 0 : index
      %c0_5 = arith.constant 0 : index
      %13 = vector.load %arg6[%c0_4, %c0_5] : memref<128x128xbf16, #tpu.memory_space<vmem>>, vector<128x128xbf16>
      %c0_6 = arith.constant 0 : index
      %c0_7 = arith.constant 0 : index
      %14 = vector.load %arg7[%c0_6, %c0_7] : memref<128x128xbf16, #tpu.memory_space<vmem>>, vector<128x128xbf16>
      %cst = arith.constant dense<0.000000e+00> : vector<128x128xf32>
      %15 = tpu.matmul %13, %14, %cst {dimension_numbers = #tpu.dot_dimension_numbers<[1], [0], [0], [1], [0, 0, 1, 1], [], []>} : vector<128x128xbf16>, vector<128x128xbf16>, vector<128x128xf32> -> vector<128x128xf32>
      %c0_8 = arith.constant 0 : index
      %c0_9 = arith.constant 0 : index
      %16 = vector.load %arg8[%c0_8, %c0_9] : memref<128x128xbf16, #tpu.memory_space<vmem>>, vector<128x128xbf16>
      %cst_10 = arith.constant dense<0.000000e+00> : vector<128x128xf32>
      %17 = tpu.matmul %12, %16, %cst_10 {dimension_numbers = #tpu.dot_dimension_numbers<[1], [0], [0], [1], [0, 0, 1, 1], [], []>} : vector<128x128xbf16>, vector<128x128xbf16>, vector<128x128xf32> -> vector<128x128xf32>
      %18 = arith.addf %15, %17 : vector<128x128xf32>
      %c0_11 = arith.constant 0 : index
      %c0_12 = arith.constant 0 : index
      %19 = vector.load %arg9[%c0_11, %c0_12] : memref<1x128xf32, #tpu.memory_space<vmem>>, vector<1x128xf32>
      %20 = vector.broadcast %19 : vector<1x128xf32> to vector<128x128xf32>
      %21 = arith.addf %18, %20 : vector<128x128xf32>
      %cst_13 = arith.constant 0.000000e+00 : f32
      %22 = vector.broadcast %cst_13 : f32 to vector<128x128xf32>
      %23 = arith.maximumf %21, %22 : vector<128x128xf32>
      %24 = arith.truncf %23 : vector<128x128xf32> to vector<128x128xbf16>
      %c0_14 = arith.constant 0 : index
      %c0_15 = arith.constant 0 : index
      %25 = vector.load %arg10[%c0_14, %c0_15] : memref<128x128xbf16, #tpu.memory_space<vmem>>, vector<128x128xbf16>
      tpu.vector_store %arg10[%c0_14, %c0_15], %24 {strides = array<i32>} : memref<128x128xbf16, #tpu.memory_space<vmem>>, vector<128x128xbf16>,
    } else {
    }
    return
  }
  func.func @transform_0(%arg0: i32, %arg1: i32, %arg2: memref<8xi32, #tpu.memory_space<smem>>, %arg3: memref<4xi32, #tpu.memory_space<smem>>) -> (i32, i32) {
    %c2_i32 = arith.constant 2 : i32
    %0 = arith.muli %arg0, %c2_i32 : i32
    %1 = arith.addi %0, %arg1 : i32
    %2 = arith.index_cast %1 : i32 to index
    %3 = memref.load %arg2[%2] : memref<8xi32, #tpu.memory_space<smem>>
    %c0_i32 = arith.constant 0 : i32
    return %arg0, %3 : i32, i32
  }
  func.func @transform_1(%arg0: i32, %arg1: i32, %arg2: memref<8xi32, #tpu.memory_space<smem>>, %arg3: memref<4xi32, #tpu.memory_space<smem>>) -> (i32, i32) {
    %c0_i32 = arith.constant 0 : i32
    %c0_i32_0 = arith.constant 0 : i32
    %c0_i32_1 = arith.constant 0 : i32
    return %c0_i32, %c0_i32_0 : i32, i32
  }
  func.func @transform_2(%arg0: i32, %arg1: i32, %arg2: memref<8xi32, #tpu.memory_space<smem>>, %arg3: memref<4xi32, #tpu.memory_space<smem>>) -> (i32, i32) {
    %c0_i32 = arith.constant 0 : i32
    %c0_i32_0 = arith.constant 0 : i32
    return %arg0, %c0_i32 : i32, i32
  }
  func.func @transform_3(%arg0: i32, %arg1: i32, %arg2: memref<8xi32, #tpu.memory_space<smem>>, %arg3: memref<4xi32, #tpu.memory_space<smem>>) -> (i32, i32) {
    %c0_i32 = arith.constant 0 : i32
    %c0_i32_0 = arith.constant 0 : i32
    %c0_i32_1 = arith.constant 0 : i32
    return %c0_i32, %c0_i32_0 : i32, i32
  }
  func.func @transform_4(%arg0: i32, %arg1: i32, %arg2: memref<8xi32, #tpu.memory_space<smem>>, %arg3: memref<4xi32, #tpu.memory_space<smem>>) -> (i32, i32) {
    %c0_i32 = arith.constant 0 : i32
    %c0_i32_0 = arith.constant 0 : i32
    %c0_i32_1 = arith.constant 0 : i32
    return %c0_i32, %c0_i32_0 : i32, i32
  }
  func.func @transform_5(%arg0: i32, %arg1: i32, %arg2: memref<8xi32, #tpu.memory_space<smem>>, %arg3: memref<4xi32, #tpu.memory_space<smem>>) -> (i32, i32) {
    %c0_i32 = arith.constant 0 : i32
    %c0_i32_0 = arith.constant 0 : i32
    %c0_i32_1 = arith.constant 0 : i32
    return %c0_i32, %c0_i32_0 : i32, i32
  }
  func.func @transform_6(%arg0: i32, %arg1: i32, %arg2: memref<8xi32, #tpu.memory_space<smem>>, %arg3: memref<4xi32, #tpu.memory_space<smem>>) -> (i32, i32) {
    %c0_i32 = arith.constant 0 : i32
    %c0_i32_0 = arith.constant 0 : i32
    return %arg0, %c0_i32 : i32, i32
  }
}

</mosaic_0001>

<llo_original>
// kernel: tpu_custom_call.1
$region0: #{tpu_custom_call.1}
  #allocation0 [shape = 'u32[]', space=smem, size = 0x4, offset = 0x4, fixed_abs, tag = 'smem constant byte address 0x4 - core index']
  #allocation1 [shape = 'u32[144,128]{1,0:T(1,128)}', space=vmem, size = 0x12000, scoped, tag = 'internal scratch']
  #allocation2 [shape = 'f32[128,128]{1,0:T(8,128)}', space=vmem, size = 0x10000, scoped, tag = 'scratch operand']
  #allocation3 [shape = 's32[1]{0}', space=sflag, size = 0x4, scoped, tag = 'scoped memory for tpu_custom_call.1']
  #allocation4 [shape = 'u8[512]{0}', space=smem, size = 0x200, scoped, tag = 'prefetched SMEM operand 0']
  #allocation5 [shape = 'u8[512]{0}', space=smem, size = 0x200, scoped, tag = 'prefetched SMEM operand 1']
  %s0 = inlined_call_operand.hbm [shape: s32[8], index: 0, kind: input, shape index: {}]
  %s1 = inlined_call_operand.vmem [shape: s32[4], index: 1, kind: input, shape index: {}]
  %s2 = inlined_call_operand.hbm [shape: bf16[512,512], index: 2, kind: input, shape index: {}]
  %s3 = inlined_call_operand.hbm [shape: bf16[512,128], index: 3, kind: input, shape index: {}]
  %s4 = inlined_call_operand.hbm [shape: bf16[512,128], index: 4, kind: input, shape index: {}]
  %s5 = inlined_call_operand.hbm [shape: bf16[128,128], index: 5, kind: input, shape index: {}]
  %s6 = inlined_call_operand.hbm [shape: bf16[128,128], index: 6, kind: input, shape index: {}]
  %s7 = inlined_call_operand.vmem [shape: f32[1,128], index: 7, kind: input, shape index: {}]
  %s8 = inlined_call_operand.hbm [shape: bf16[512,128], index: 8, kind: output, shape index: {}]
  %s9 = sld [smem:[#allocation0]]
  $region89: #{tpu_custom_call.1} parent=0
    _
  %s11 = ssub.s32 1, %s9
  %s12 = scalar_select 0, %s11, %s9
  %14 = dma.hbm_to_smem %s0, 16, [#allocation4], [#allocation3]
  %s15 = sshll.u32 %s1, 4
  %s16 = int_to_ptr.vmem [resolvable:$true] %s15
  %18 = dma.vmem_to_smem %s16, 16, [#allocation5], [#allocation3]
  %19 = dma.done [#allocation3], 32
  %20 = sfence
  $region1: #{tpu_custom_call.1} parent=0
    #allocation6 [shape = 'u8[131072]{0}', space=vmem, size = 0x20000, scoped, tag = 'input window, operand 2']
    #allocation7 [shape = 's32[2]{0}', space=sflag, size = 0x8, scoped, tag = 'scoped memory for tpu_custom_call.1']
    #allocation8 [shape = 's32[2]{0}', space=sflag, size = 0x8, scoped, tag = 'scoped memory for tpu_custom_call.1']
    #allocation9 [shape = 'u8[131072]{0}', space=vmem, size = 0x20000, scoped, tag = 'input window, operand 3, single buffered']
    #allocation10 [shape = 's32[1]{0}', space=sflag, size = 0x4, scoped, tag = 'scoped memory for tpu_custom_call.1']
    #allocation11 [shape = 'u8[65536]{0}', space=vmem, size = 0x10000, scoped, tag = 'input window, operand 4']
    #allocation12 [shape = 'u8[32768]{0}', space=vmem, size = 0x8000, scoped, tag = 'input window, operand 5, single buffered']
    #allocation13 [shape = 'u8[32768]{0}', space=vmem, size = 0x8000, scoped, tag = 'input window, operand 6, single buffered']
    #allocation14 [shape = 's32[1]{0}', space=sflag, size = 0x4, scoped, tag = 'scoped memory for tpu_custom_call.1']
    #allocation15 [shape = 'u8[65536]{0}', space=vmem, size = 0x10000, scoped, tag = 'output window, operand 0']
    %21 = vsyncpa [#allocation7], 0
    %s22 = scalar_lea.sflag [#allocation7], 1
    %23 = vsyncpa %s22, 0
    %24 = vsyncpa [#allocation10], 0
    %25 = vsyncpa [#allocation14], 0
    %26 = vsyncpa [#allocation8], 0
    %s27 = scalar_lea.sflag [#allocation8], 1
    %28 = vsyncpa %s27, 0
    loop: start=0, step=1, limit=10
    $region2: #{tpu_custom_call.1} parent=1 // loop_pre_header
      _
    $region3: #{tpu_custom_call.1} parent=1 // loop_header
      %s30 = sphi 0, %s34
      %p31 = scmp.ge.s32.totalorder %s30, 10
      %s37 = sphi 0, %s49
      %s38 = sphi 0, %s45
      %s39 = sphi 0, %s37
      %s40 = sphi 0, %s38
      %s41 = sphi 0, %s39
      %s42 = sphi 0, %s40
      %s60 = sphi 0, %s62
      %s63 = sphi 0, %s60
      %s64 = sphi 0, %s63
      %s80 = sphi 0, %s64
      %s84 = sphi 0, %s84
      %s86 = sphi 0, %s84
      %s87 = sphi 0, %s86
      %s101 = sphi 0, %s87
      %s107 = sphi 0, %s109
      %s110 = sphi 0, %s107
      %s111 = sphi 0, %s110
      %s127 = sphi 0, %s111
      %s131 = sphi 0, %s131
      %s133 = sphi 0, %s131
      %s134 = sphi 0, %s133
      %s148 = sphi 0, %s134
      %s152 = sphi 0, %s152
      %s154 = sphi 0, %s152
      %s155 = sphi 0, %s154
      %s169 = sphi 0, %s155
      %s173 = sphi 0, %s173
      %s175 = sphi 0, %s173
      %s176 = sphi 0, %s175
      %s190 = sphi 0, %s176
      %s196 = sphi 0, %s198
      %s199 = sphi 0, %s196
      %s200 = sphi 0, %s199
      %s216 = sphi 0, %s200
    $region4: #{tpu_custom_call.1} parent=1 // loop_header_branch
      %33 = sbr.rel (%p31) target = $region8
    $region5: #{tpu_custom_call.1} parent=1 // loop_body
      %s35 = ssub.s32 %s30, 1
      %s36 = ssub.s32 %s30, 2
      %s43 = sadd.s32 1, %s38
      %p44 = scmp.ge.s32.totalorder %s43, 2
      %s45 = scalar_select %p44, 0, %s43
      %s46 = sadd.s32 1, %s37
      %s47 = scalar_select %p44, %s46, %s37
      %p48 = scmp.ge.s32.totalorder %s47, 4
      %s49 = scalar_select %p48, 0, %s47
      %s50 = smul.u32 %s37, 2
      %s51 = sadd.s32 %s50, %s38
      %s52 = sld [smem:[#allocation4 + %s51]]
      %s53 = smul.u32 %s49, 2
      %s54 = sadd.s32 %s53, %s45
      %s55 = sld [smem:[#allocation4 + %s54]]
      %s56 = ssub.s32 %s37, %s49
      %s57 = ssub.s32 %s52, %s55
      %s58 = sor.u32 %s56, %s57
      %p59 = scmp.eq.s32.totalorder %s58, 0
      %s61 = sadd.s32 %s60, 1
      %s62 = scalar_select %p59, %s60, %s61
      %p65 = pneg %p59
      %p66 = scmp.eq.s32.totalorder %s30, 7
      %p67 = por %p65, %p66
      %p68 = scmp.ne.s32.totalorder %s60, %s63
      %p69 = scmp.eq.s32.totalorder %s30, 0
      %p70 = por %p68, %p69
      %p71 = scmp.ne.s32.totalorder %s60, %s63
      %p72 = scmp.eq.s32.totalorder %s35, 7
      %p73 = por %p71, %p72
      %p74 = scmp.ne.s32.totalorder %s63, %s64
      %p75 = scmp.eq.s32.totalorder %s35, 0
      %p76 = por %p74, %p75
      %p77 = scmp.ne.s32.totalorder %s63, %s64
      %p78 = scmp.eq.s32.totalorder %s36, 7
      %p79 = por %p77, %p78
      %p81 = scmp.ne.s32.totalorder %s64, %s80
      %p82 = scmp.eq.s32.totalorder %s36, 0
      %p83 = por %p81, %p82
      %s85 = sadd.s32 %s84, 1
      %p88 = scmp.eq.s32.totalorder %s30, 7
      %p89 = scmp.ne.s32.totalorder %s84, %s86
      %p90 = scmp.eq.s32.totalorder %s30, 0
      %p91 = por %p89, %p90
      %p92 = scmp.ne.s32.totalorder %s84, %s86
      %p93 = scmp.eq.s32.totalorder %s35, 7
      %p94 = por %p92, %p93
      %p95 = scmp.ne.s32.totalorder %s86, %s87
      %p96 = scmp.eq.s32.totalorder %s35, 0
      %p97 = por %p95, %p96
      %p98 = scmp.ne.s32.totalorder %s86, %s87
      %p99 = scmp.eq.s32.totalorder %s36, 7
      %p100 = por %p98, %p99
      %p102 = scmp.ne.s32.totalorder %s87, %s101
      %p103 = scmp.eq.s32.totalorder %s36, 0
      %p104 = por %p102, %p103
      %s105 = ssub.s32 %s37, %s49
      %p106 = scmp.eq.s32.totalorder %s105, 0
      %s108 = sadd.s32 %s107, 1
      %s109 = scalar_select %p106, %s107, %s108
      %p112 = pneg %p106
      %p113 = scmp.eq.s32.totalorder %s30, 7
      %p114 = por %p112, %p113
      %p115 = scmp.ne.s32.totalorder %s107, %s110
      %p116 = scmp.eq.s32.totalorder %s30, 0
      %p117 = por %p115, %p116
      %p118 = scmp.ne.s32.totalorder %s107, %s110
      %p119 = scmp.eq.s32.totalorder %s35, 7
      %p120 = por %p118, %p119
      %p121 = scmp.ne.s32.totalorder %s110, %s111
      %p122 = scmp.eq.s32.totalorder %s35, 0
      %p123 = por %p121, %p122
      %p124 = scmp.ne.s32.totalorder %s110, %s111
      %p125 = scmp.eq.s32.totalorder %s36, 7
      %p126 = por %p124, %p125
      %p128 = scmp.ne.s32.totalorder %s111, %s127
      %p129 = scmp.eq.s32.totalorder %s36, 0
      %p130 = por %p128, %p129
      %s132 = sadd.s32 %s131, 1
      %p135 = scmp.eq.s32.totalorder %s30, 7
      %p136 = scmp.ne.s32.totalorder %s131, %s133
      %p137 = scmp.eq.s32.totalorder %s30, 0
      %p138 = por %p136, %p137
      %p139 = scmp.ne.s32.totalorder %s131, %s133
      %p140 = scmp.eq.s32.totalorder %s35, 7
      %p141 = por %p139, %p140
      %p142 = scmp.ne.s32.totalorder %s133, %s134
      %p143 = scmp.eq.s32.totalorder %s35, 0
      %p144 = por %p142, %p143
      %p145 = scmp.ne.s32.totalorder %s133, %s134
      %p146 = scmp.eq.s32.totalorder %s36, 7
      %p147 = por %p145, %p146
      %p149 = scmp.ne.s32.totalorder %s134, %s148
      %p150 = scmp.eq.s32.totalorder %s36, 0
      %p151 = por %p149, %p150
      %s153 = sadd.s32 %s152, 1
      %p156 = scmp.eq.s32.totalorder %s30, 7
      %p157 = scmp.ne.s32.totalorder %s152, %s154
      %p158 = scmp.eq.s32.totalorder %s30, 0
      %p159 = por %p157, %p158
      %p160 = scmp.ne.s32.totalorder %s152, %s154
      %p161 = scmp.eq.s32.totalorder %s35, 7
      %p162 = por %p160, %p161
      %p163 = scmp.ne.s32.totalorder %s154, %s155
      %p164 = scmp.eq.s32.totalorder %s35, 0
      %p165 = por %p163, %p164
      %p166 = scmp.ne.s32.totalorder %s154, %s155
      %p167 = scmp.eq.s32.totalorder %s36, 7
      %p168 = por %p166, %p167
      %p170 = scmp.ne.s32.totalorder %s155, %s169
      %p171 = scmp.eq.s32.totalorder %s36, 0
      %p172 = por %p170, %p171
      %s174 = sadd.s32 %s173, 1
      %p177 = scmp.eq.s32.totalorder %s30, 7
      %p178 = scmp.ne.s32.totalorder %s173, %s175
      %p179 = scmp.eq.s32.totalorder %s30, 0
      %p180 = por %p178, %p179
      %p181 = scmp.ne.s32.totalorder %s173, %s175
      %p182 = scmp.eq.s32.totalorder %s35, 7
      %p183 = por %p181, %p182
      %p184 = scmp.ne.s32.totalorder %s175, %s176
      %p185 = scmp.eq.s32.totalorder %s35, 0
      %p186 = por %p184, %p185
      %p187 = scmp.ne.s32.totalorder %s175, %s176
      %p188 = scmp.eq.s32.totalorder %s36, 7
      %p189 = por %p187, %p188
      %p191 = scmp.ne.s32.totalorder %s176, %s190
      %p192 = scmp.eq.s32.totalorder %s36, 0
      %p193 = por %p191, %p192
      %s194 = ssub.s32 %s37, %s49
      %p195 = scmp.eq.s32.totalorder %s194, 0
      %s197 = sadd.s32 %s196, 1
      %s198 = scalar_select %p195, %s196, %s197
      %p201 = pneg %p195
      %p202 = scmp.eq.s32.totalorder %s30, 7
      %p203 = por %p201, %p202
      %p204 = scmp.ne.s32.totalorder %s196, %s199
      %p205 = scmp.eq.s32.totalorder %s30, 0
      %p206 = por %p204, %p205
      %p207 = scmp.ne.s32.totalorder %s196, %s199
      %p208 = scmp.eq.s32.totalorder %s35, 7
      %p209 = por %p207, %p208
      %p210 = scmp.ne.s32.totalorder %s199, %s200
      %p211 = scmp.eq.s32.totalorder %s35, 0
      %p212 = por %p210, %p211
      %p213 = scmp.ne.s32.totalorder %s199, %s200
      %p214 = scmp.eq.s32.totalorder %s36, 7
      %p215 = por %p213, %p214
      %p217 = scmp.ne.s32.totalorder %s200, %s216
      %p218 = scmp.eq.s32.totalorder %s36, 0
      %p219 = por %p217, %p218
      %p220 = scmp.le.s32.totalorder 1, %s30
      %p221 = scmp.lt.s32.totalorder %s30, 9
      %p222 = pnand %p220, %p221
      %p223 = pneg %p222
      // Predicated region
      $region9: #{tpu_custom_call.1} parent=5 // pred_check
        _
      $region10: #{tpu_custom_call.1} parent=5 // pred_check_branch
        %225 = sbr.rel (%p222) target = $region12
      $region11: #{tpu_custom_call.1} parent=5 // pred_region
        %s226 = ssub.s32 %s30, 1
        // Predicated region
        $region13: #{tpu_custom_call.1} parent=11 // pred_check
          %p227 = pneg %p97
        $region14: #{tpu_custom_call.1} parent=11 // pred_check_branch
          %229 = sbr.rel (%p227) target = $region16
        $region15: #{tpu_custom_call.1} parent=11 // pred_region
          %s231 = ssub.s32 4096, 4096
          %232 = vsyncadd [#allocation10], %s231
          %s233 = sshll.u32 [#allocation9], 4
          %s234 = int_to_ptr.vmem [resolvable:$true] %s233
          %239 = dma.hbm_to_vmem [thread:$0]  %s3, 4096, %s234, [#allocation10], 64, 64, 4
        $region16: #{tpu_custom_call.1} parent=11 // pred_fallthru
          _
        // Predicated region
        $region17: #{tpu_custom_call.1} parent=11 // pred_check
          %p240 = pneg %p144
        $region18: #{tpu_custom_call.1} parent=11 // pred_check_branch
          %242 = sbr.rel (%p240) target = $region20
        $region19: #{tpu_custom_call.1} parent=11 // pred_region
          %s244 = ssub.s32 1024, 1024
          %245 = vsyncadd [#allocation10], %s244
          %s246 = sshll.u32 [#allocation12], 4
          %s247 = int_to_ptr.vmem [resolvable:$true] %s246
          %252 = dma.hbm_to_vmem [thread:$0]  %s5, 1024, %s247, [#allocation10], 64, 64, 4
        $region20: #{tpu_custom_call.1} parent=11 // pred_fallthru
          _
        // Predicated region
        $region21: #{tpu_custom_call.1} parent=11 // pred_check
          %p253 = pneg %p165
        $region22: #{tpu_custom_call.1} parent=11 // pred_check_branch
          %255 = sbr.rel (%p253) target = $region24
        $region23: #{tpu_custom_call.1} parent=11 // pred_region
          %s257 = ssub.s32 1024, 1024
          %258 = vsyncadd [#allocation14], %s257
          %s259 = sshll.u32 [#allocation13], 4
          %s260 = int_to_ptr.vmem [resolvable:$true] %s259
          %265 = dma.hbm_to_vmem [thread:$0]  %s6, 1024, %s260, [#allocation14], 64, 64, 4
        $region24: #{tpu_custom_call.1} parent=11 // pred_fallthru
          _
        // Predicated region
        $region25: #{tpu_custom_call.1} parent=11 // pred_check
          %p266 = pneg %p186
        $region26: #{tpu_custom_call.1} parent=11 // pred_check_branch
          %268 = sbr.rel (%p266) target = $region28
        $region27: #{tpu_custom_call.1} parent=11 // pred_region
          _
        $region28: #{tpu_custom_call.1} parent=11 // pred_fallthru
          _
      $region12: #{tpu_custom_call.1} parent=5 // pred_fallthru
        _
      %p269 = scmp.lt.s32.totalorder %s30, 8
      // Predicated region
      $region29: #{tpu_custom_call.1} parent=5 // pred_check
        %p270 = pneg %p269
      $region30: #{tpu_custom_call.1} parent=5 // pred_check_branch
        %272 = sbr.rel (%p270) target = $region32
      $region31: #{tpu_custom_call.1} parent=5 // pred_region
        // Predicated region
        $region33: #{tpu_custom_call.1} parent=31 // pred_check
          %p273 = pneg %p70
        $region34: #{tpu_custom_call.1} parent=31 // pred_check_branch
          %275 = sbr.rel (%p273) target = $region36
        $region35: #{tpu_custom_call.1} parent=31 // pred_region
          %s276 = sand.u32 %s30, 1
          %s277 = scalar_lea.sflag [#allocation7], %s276
          %s278 = sand.u32 %s60, 1
          %s279 = smul.addr %s278, 128
          %s280 = scalar_lea.vmem [#allocation6], %s279
          %s281 = smul.u32 %s37, 2
          %s282 = sadd.s32 %s281, %s38
          %s283 = sld [smem:[#allocation4 + %s282]]
          %s284 = smul.u32 16, %s37
          %s285 = smul.u32 2, %s283
          %s287 = ssub.s32 2048, 2048
          %288 = vsyncadd %s277, %s287
          %s289 = smul.addr %s284, 4
          %s290 = sadd.s32 %s285, %s289
          %s291 = smul.addr %s290, 64
          %s292 = scalar_lea.hbm %s2, %s291
          %s293 = sshll.u32 %s280, 4
          %s294 = int_to_ptr.vmem [resolvable:$true] %s293
          %299 = dma.hbm_to_vmem [thread:$0]  %s292, 2048, %s294, %s277, 256, 128, 8
        $region36: #{tpu_custom_call.1} parent=31 // pred_fallthru
          _
        // Predicated region
        $region37: #{tpu_custom_call.1} parent=31 // pred_check
          %p300 = pneg %p117
        $region38: #{tpu_custom_call.1} parent=31 // pred_check_branch
          %302 = sbr.rel (%p300) target = $region40
        $region39: #{tpu_custom_call.1} parent=31 // pred_region
          %s303 = sand.u32 %s30, 1
          %s304 = scalar_lea.sflag [#allocation7], %s303
          %s305 = sand.u32 %s107, 1
          %s306 = smul.addr %s305, 64
          %s307 = scalar_lea.vmem [#allocation11], %s306
          %s308 = smul.u32 16, %s37
          %s310 = ssub.s32 1024, 1024
          %311 = vsyncadd %s304, %s310
          %s312 = smul.addr %s308, 64
          %s313 = scalar_lea.hbm %s4, %s312
          %s314 = sshll.u32 %s307, 4
          %s315 = int_to_ptr.vmem [resolvable:$true] %s314
          %320 = dma.hbm_to_vmem [thread:$0]  %s313, 1024, %s315, %s304, 64, 64, 4
        $region40: #{tpu_custom_call.1} parent=31 // pred_fallthru
          _
      $region32: #{tpu_custom_call.1} parent=5 // pred_fallthru
        _
      %p321 = scmp.le.s32.totalorder 1, %s30
      %p322 = scmp.lt.s32.totalorder %s30, 9
      %p323 = pnand %p321, %p322
      %p324 = pneg %p323
      // Predicated region
      $region41: #{tpu_custom_call.1} parent=5 // pred_check
        _
      $region42: #{tpu_custom_call.1} parent=5 // pred_check_branch
        %326 = sbr.rel (%p323) target = $region44
      $region43: #{tpu_custom_call.1} parent=5 // pred_region
        %s327 = ssub.s32 %s30, 1
        %s328 = sand.u32 %s35, 1
        %s329 = scalar_lea.sflag [#allocation7], %s328
        %s330 = sand.u32 %s63, 1
        %s331 = smul.addr %s330, 128
        %s332 = scalar_lea.vmem [#allocation6], %s331
        // Predicated region
        $region45: #{tpu_custom_call.1} parent=43 // pred_check
          %p333 = pneg %p76
        $region46: #{tpu_custom_call.1} parent=43 // pred_check_branch
          %335 = sbr.rel (%p333) target = $region48
        $region47: #{tpu_custom_call.1} parent=43 // pred_region
          %336 = dma.done %s329, 2048
        $region48: #{tpu_custom_call.1} parent=43 // pred_fallthru
          _
        // Predicated region
        $region49: #{tpu_custom_call.1} parent=43 // pred_check
          %p337 = pneg %p97
        $region50: #{tpu_custom_call.1} parent=43 // pred_check_branch
          %339 = sbr.rel (%p337) target = $region52
        $region51: #{tpu_custom_call.1} parent=43 // pred_region
          %340 = dma.done [#allocation10], 4096
        $region52: #{tpu_custom_call.1} parent=43 // pred_fallthru
          _
        %s341 = sand.u32 %s35, 1
        %s342 = scalar_lea.sflag [#allocation7], %s341
        %s343 = sand.u32 %s110, 1
        %s344 = smul.addr %s343, 64
        %s345 = scalar_lea.vmem [#allocation11], %s344
        // Predicated region
        $region53: #{tpu_custom_call.1} parent=43 // pred_check
          %p346 = pneg %p123
        $region54: #{tpu_custom_call.1} parent=43 // pred_check_branch
          %348 = sbr.rel (%p346) target = $region56
        $region55: #{tpu_custom_call.1} parent=43 // pred_region
          %349 = dma.done %s342, 1024
        $region56: #{tpu_custom_call.1} parent=43 // pred_fallthru
          _
        // Predicated region
        $region57: #{tpu_custom_call.1} parent=43 // pred_check
          %p350 = pneg %p144
        $region58: #{tpu_custom_call.1} parent=43 // pred_check_branch
          %352 = sbr.rel (%p350) target = $region60
        $region59: #{tpu_custom_call.1} parent=43 // pred_region
          %353 = dma.done [#allocation10], 1024
        $region60: #{tpu_custom_call.1} parent=43 // pred_fallthru
          _
        // Predicated region
        $region61: #{tpu_custom_call.1} parent=43 // pred_check
          %p354 = pneg %p165
        $region62: #{tpu_custom_call.1} parent=43 // pred_check_branch
          %356 = sbr.rel (%p354) target = $region64
        $region63: #{tpu_custom_call.1} parent=43 // pred_region
          %357 = dma.done [#allocation14], 1024
        $region64: #{tpu_custom_call.1} parent=43 // pred_fallthru
          _
        %s358 = sand.u32 %s35, 1
        %s359 = scalar_lea.sflag [#allocation7], %s358
        %s360 = sand.u32 %s63, 1
        %s361 = smul.addr %s360, 128
        %s362 = scalar_lea.vmem [#allocation6], %s361
        %p363 = pneg %p76
        %p364 = pneg %p73
        %p365 = pneg %p97
        %p366 = pneg %p94
        %s367 = sand.u32 %s35, 1
        %s368 = scalar_lea.sflag [#allocation7], %s367
        %s369 = sand.u32 %s110, 1
        %s370 = smul.addr %s369, 64
        %s371 = scalar_lea.vmem [#allocation11], %s370
        %p372 = pneg %p123
        %p373 = pneg %p120
        %p374 = pneg %p144
        %p375 = pneg %p141
        %p376 = pneg %p165
        %p377 = pneg %p162
        %p378 = pneg %p186
        %p379 = pneg %p183
        %p380 = pneg %p212
        %p381 = pneg %p209
        %s382 = sand.u32 %s199, 1
        %s383 = scalar_lea.sflag [#allocation8], %s382
        %s384 = sand.u32 %s199, 1
        %s385 = smul.addr %s384, 64
        %s386 = scalar_lea.vmem [#allocation15], %s385
        %s387 = smul.u32 %s39, 2
        %s388 = sadd.s32 %s387, %s40
        %s389 = sld [smem:[#allocation4 + %s388]]
        %s390 = smul.u32 16, %s39
        %s391 = smul.u32 2, %s389
        %s392 = smul.u32 16, %s39
        %s393 = smul.u32 16, %s39
        %p395 = scmp.eq.s32.totalorder %s40, 0
        // Predicated region
        $region65: #{tpu_custom_call.1} parent=43 // pred_check
          %p396 = pneg %p395
        $region66: #{tpu_custom_call.1} parent=43 // pred_check_branch
          %398 = sbr.rel (%p396) target = $region68
        $region67: #{tpu_custom_call.1} parent=43 // pred_region
          %399 = vst [vmem:[#allocation2] sm:$0xff] 0.0
          %400 = vst [vmem:[#allocation2 + $0x8] sm:$0xff] 0.0
          %401 = vst [vmem:[#allocation2 + $0x10] sm:$0xff] 0.0
          %402 = vst [vmem:[#allocation2 + $0x18] sm:$0xff] 0.0
          %403 = vst [vmem:[#allocation2 + $0x20] sm:$0xff] 0.0
          %404 = vst [vmem:[#allocation2 + $0x28] sm:$0xff] 0.0
          %405 = vst [vmem:[#allocation2 + $0x30] sm:$0xff] 0.0
          %406 = vst [vmem:[#allocation2 + $0x38] sm:$0xff] 0.0
          %407 = vst [vmem:[#allocation2 + $0x40] sm:$0xff] 0.0
          %408 = vst [vmem:[#allocation2 + $0x48] sm:$0xff] 0.0
          %409 = vst [vmem:[#allocation2 + $0x50] sm:$0xff] 0.0
          %410 = vst [vmem:[#allocation2 + $0x58] sm:$0xff] 0.0
          %411 = vst [vmem:[#allocation2 + $0x60] sm:$0xff] 0.0
          %412 = vst [vmem:[#allocation2 + $0x68] sm:$0xff] 0.0
          %413 = vst [vmem:[#allocation2 + $0x70] sm:$0xff] 0.0
          %414 = vst [vmem:[#allocation2 + $0x78] sm:$0xff] 0.0
        $region68: #{tpu_custom_call.1} parent=43 // pred_fallthru
          _
        %s415 = sld [smem:[#allocation5 + %s39]]
        %p416 = scmp.lt.s32.totalorder %s40, %s415
        // Predicated region
        $region69: #{tpu_custom_call.1} parent=43 // pred_check
          %p417 = pneg %p416
        $region70: #{tpu_custom_call.1} parent=43 // pred_check_branch
          %419 = sbr.rel (%p417) target = $region72
        $region71: #{tpu_custom_call.1} parent=43 // pred_region
          %s420 = smul.u32 %s39, 2
          %s421 = sadd.s32 %s420, %s40
          %s422 = sld [smem:[#allocation4 + %s421]]
          %s423 = smul.u32 %s422, 256
          %s424 = sshra.s32 %s423, 3
          %s425 = sand.u32 %s423, 7
          %s426 = smul.addr %s424, 4
          %s427 = scalar_lea.vmem [#allocation9], %s426
          %v428 = vld [vmem:[%s427] sm:$0xf]
          %v429 = vld [vmem:[%s427 + $0x4] sm:$0xf]
          %v430 = vld [vmem:[%s427 + $0x8] sm:$0xf]
          %v431 = vld [vmem:[%s427 + $0xc] sm:$0xf]
          %v432 = vld [vmem:[%s427 + $0x10] sm:$0xf]
          %v433 = vld [vmem:[%s427 + $0x14] sm:$0xf]
          %v434 = vld [vmem:[%s427 + $0x18] sm:$0xf]
          %v435 = vld [vmem:[%s427 + $0x1c] sm:$0xf]
          %v436 = vld [vmem:[%s427 + $0x20] sm:$0xf]
          %v437 = vld [vmem:[%s427 + $0x24] sm:$0xf]
          %v438 = vld [vmem:[%s427 + $0x28] sm:$0xf]
          %v439 = vld [vmem:[%s427 + $0x2c] sm:$0xf]
          %v440 = vld [vmem:[%s427 + $0x30] sm:$0xf]
          %v441 = vld [vmem:[%s427 + $0x34] sm:$0xf]
          %v442 = vld [vmem:[%s427 + $0x38] sm:$0xf]
          %v443 = vld [vmem:[%s427 + $0x3c] sm:$0xf]
          %v444 = vld [vmem:[%s427 + $0x40] sm:$0xf]
          %v445 = vld [vmem:[%s427 + $0x44] sm:$0xf]
          %v446 = vld [vmem:[%s427 + $0x48] sm:$0xf]
          %v447 = vld [vmem:[%s427 + $0x4c] sm:$0xf]
          %v448 = vld [vmem:[%s427 + $0x50] sm:$0xf]
          %v449 = vld [vmem:[%s427 + $0x54] sm:$0xf]
          %v450 = vld [vmem:[%s427 + $0x58] sm:$0xf]
          %v451 = vld [vmem:[%s427 + $0x5c] sm:$0xf]
          %v452 = vld [vmem:[%s427 + $0x60] sm:$0xf]
          %v453 = vld [vmem:[%s427 + $0x64] sm:$0xf]
          %v454 = vld [vmem:[%s427 + $0x68] sm:$0xf]
          %v455 = vld [vmem:[%s427 + $0x6c] sm:$0xf]
          %v456 = vld [vmem:[%s427 + $0x70] sm:$0xf]
          %v457 = vld [vmem:[%s427 + $0x74] sm:$0xf]
          %v458 = vld [vmem:[%s427 + $0x78] sm:$0xf]
          %v459 = vld [vmem:[%s427 + $0x7c] sm:$0xf]
          %v460 = vld [vmem:[#allocation2] sm:$0xff]
          %v461 = vld [vmem:[#allocation2 + $0x8] sm:$0xff]
          %v462 = vld [vmem:[#allocation2 + $0x10] sm:$0xff]
          %v463 = vld [vmem:[#allocation2 + $0x18] sm:$0xff]
          %v464 = vld [vmem:[#allocation2 + $0x20] sm:$0xff]
          %v465 = vld [vmem:[#allocation2 + $0x28] sm:$0xff]
          %v466 = vld [vmem:[#allocation2 + $0x30] sm:$0xff]
          %v467 = vld [vmem:[#allocation2 + $0x38] sm:$0xff]
          %v468 = vld [vmem:[#allocation2 + $0x40] sm:$0xff]
          %v469 = vld [vmem:[#allocation2 + $0x48] sm:$0xff]
          %v470 = vld [vmem:[#allocation2 + $0x50] sm:$0xff]
          %v471 = vld [vmem:[#allocation2 + $0x58] sm:$0xff]
          %v472 = vld [vmem:[#allocation2 + $0x60] sm:$0xff]
          %v473 = vld [vmem:[#allocation2 + $0x68] sm:$0xff]
          %v474 = vld [vmem:[#allocation2 + $0x70] sm:$0xff]
          %v475 = vld [vmem:[#allocation2 + $0x78] sm:$0xff]
          %v476 = vld [vmem:[%s332] sm:$0xff]
          %v477 = vld [vmem:[%s332 + $0x8] sm:$0xff]
          %v478 = vld [vmem:[%s332 + $0x10] sm:$0xff]
          %v479 = vld [vmem:[%s332 + $0x18] sm:$0xff]
          %v480 = vld [vmem:[%s332 + $0x20] sm:$0xff]
          %v481 = vld [vmem:[%s332 + $0x28] sm:$0xff]
          %v482 = vld [vmem:[%s332 + $0x30] sm:$0xff]
          %v483 = vld [vmem:[%s332 + $0x38] sm:$0xff]
          %v484 = vld [vmem:[%s332 + $0x40] sm:$0xff]
          %v485 = vld [vmem:[%s332 + $0x48] sm:$0xff]
          %v486 = vld [vmem:[%s332 + $0x50] sm:$0xff]
          %v487 = vld [vmem:[%s332 + $0x58] sm:$0xff]
          %v488 = vld [vmem:[%s332 + $0x60] sm:$0xff]
          %v489 = vld [vmem:[%s332 + $0x68] sm:$0xff]
          %v490 = vld [vmem:[%s332 + $0x70] sm:$0xff]
          %v491 = vld [vmem:[%s332 + $0x78] sm:$0xff]
          %v508 = vunpack.c.l.b16 %v476
          %v509 = vunpack.c.h.b16 %v476
          %v510 = vunpack.c.l.b16 %v477
          %v511 = vunpack.c.h.b16 %v477
          %v512 = vunpack.c.l.b16 %v478
          %v513 = vunpack.c.h.b16 %v478
          %v514 = vunpack.c.l.b16 %v479
          %v515 = vunpack.c.h.b16 %v479
          %v516 = vunpack.c.l.b16 %v480
          %v517 = vunpack.c.h.b16 %v480
          %v518 = vunpack.c.l.b16 %v481
          %v519 = vunpack.c.h.b16 %v481
          %v520 = vunpack.c.l.b16 %v482
          %v521 = vunpack.c.h.b16 %v482
          %v522 = vunpack.c.l.b16 %v483
          %v523 = vunpack.c.h.b16 %v483
          %v524 = vunpack.c.l.b16 %v484
          %v525 = vunpack.c.h.b16 %v484
          %v526 = vunpack.c.l.b16 %v485
          %v527 = vunpack.c.h.b16 %v485
          %v528 = vunpack.c.l.b16 %v486
          %v529 = vunpack.c.h.b16 %v486
          %v530 = vunpack.c.l.b16 %v487
          %v531 = vunpack.c.h.b16 %v487
          %v532 = vunpack.c.l.b16 %v488
          %v533 = vunpack.c.h.b16 %v488
          %v534 = vunpack.c.l.b16 %v489
          %v535 = vunpack.c.h.b16 %v489
          %v536 = vunpack.c.l.b16 %v490
          %v537 = vunpack.c.h.b16 %v490
          %v538 = vunpack.c.l.b16 %v491
          %v539 = vunpack.c.h.b16 %v491
          %v540 = vpack.c.b16 %v510, %v508
          %v541 = vpack.c.b16 %v511, %v509
          %v542 = vpack.c.b16 %v514, %v512
          %v543 = vpack.c.b16 %v515, %v513
          %v544 = vpack.c.b16 %v518, %v516
          %v545 = vpack.c.b16 %v519, %v517
          %v546 = vpack.c.b16 %v522, %v520
          %v547 = vpack.c.b16 %v523, %v521
          %v548 = vpack.c.b16 %v526, %v524
          %v549 = vpack.c.b16 %v527, %v525
          %v550 = vpack.c.b16 %v530, %v528
          %v551 = vpack.c.b16 %v531, %v529
          %v552 = vpack.c.b16 %v534, %v532
          %v553 = vpack.c.b16 %v535, %v533
          %v554 = vpack.c.b16 %v538, %v536
          %v555 = vpack.c.b16 %v539, %v537
          %v604 = vunpack.c.l.b16 %v428
          %v605 = vunpack.c.l.b16 %v429
          %v606 = vunpack.c.l.b16 %v430
          %v607 = vunpack.c.l.b16 %v431
          %v608 = vunpack.c.l.b16 %v432
          %v609 = vunpack.c.l.b16 %v433
          %v610 = vunpack.c.l.b16 %v434
          %v611 = vunpack.c.l.b16 %v435
          %v612 = vunpack.c.l.b16 %v436
          %v613 = vunpack.c.l.b16 %v437
          %v614 = vunpack.c.l.b16 %v438
          %v615 = vunpack.c.l.b16 %v439
          %v616 = vunpack.c.l.b16 %v440
          %v617 = vunpack.c.l.b16 %v441
          %v618 = vunpack.c.l.b16 %v442
          %v619 = vunpack.c.l.b16 %v443
          %v620 = vunpack.c.l.b16 %v444
          %v621 = vunpack.c.l.b16 %v445
          %v622 = vunpack.c.l.b16 %v446
          %v623 = vunpack.c.l.b16 %v447
          %v624 = vunpack.c.l.b16 %v448
          %v625 = vunpack.c.l.b16 %v449
          %v626 = vunpack.c.l.b16 %v450
          %v627 = vunpack.c.l.b16 %v451
          %v628 = vunpack.c.l.b16 %v452
          %v629 = vunpack.c.l.b16 %v453
          %v630 = vunpack.c.l.b16 %v454
          %v631 = vunpack.c.l.b16 %v455
          %v632 = vunpack.c.l.b16 %v456
          %v633 = vunpack.c.l.b16 %v457
          %v634 = vunpack.c.l.b16 %v458
          %v635 = vunpack.c.l.b16 %v459
          %v636 = vpack.c.b16 %v605, %v604
          %v637 = vpack.c.b16 %v607, %v606
          %v638 = vpack.c.b16 %v609, %v608
          %v639 = vpack.c.b16 %v611, %v610
          %v640 = vpack.c.b16 %v613, %v612
          %v641 = vpack.c.b16 %v615, %v614
          %v642 = vpack.c.b16 %v617, %v616
          %v643 = vpack.c.b16 %v619, %v618
          %v644 = vpack.c.b16 %v621, %v620
          %v645 = vpack.c.b16 %v623, %v622
          %v646 = vpack.c.b16 %v625, %v624
          %v647 = vpack.c.b16 %v627, %v626
          %v648 = vpack.c.b16 %v629, %v628
          %v649 = vpack.c.b16 %v631, %v630
          %v650 = vpack.c.b16 %v633, %v632
          %v651 = vpack.c.b16 %v635, %v634
          %668 = vmatprep.subr.bf16.mxu0 0
          %669 = vmatpush1.bf16.msra.mxu0 %v636
          %670 = vmatprep.subr.bf16.mxu0 0
          %671 = vmatpush1.bf16.msra.mxu0 %v637
          %672 = vmatprep.subr.bf16.mxu0 0
          %673 = vmatpush1.bf16.msra.mxu0 %v638
          %674 = vmatprep.subr.bf16.mxu0 0
          %675 = vmatpush1.bf16.msra.mxu0 %v639
          %676 = vmatprep.subr.bf16.mxu0 0
          %677 = vmatpush1.bf16.msra.mxu0 %v640
          %678 = vmatprep.subr.bf16.mxu0 0
          %679 = vmatpush1.bf16.msra.mxu0 %v641
          %680 = vmatprep.subr.bf16.mxu0 0
          %681 = vmatpush1.bf16.msra.mxu0 %v642
          %682 = vmatprep.subr.bf16.mxu0 0
          %683 = vmatpush1.bf16.msra.mxu0 %v643
          %684 = vmatprep.subr.bf16.mxu0 0
          %685 = vmatpush1.bf16.msra.mxu0 %v644
          %686 = vmatprep.subr.bf16.mxu0 0
          %687 = vmatpush1.bf16.msra.mxu0 %v645
          %688 = vmatprep.subr.bf16.mxu0 0
          %689 = vmatpush1.bf16.msra.mxu0 %v646
          %690 = vmatprep.subr.bf16.mxu0 0
          %691 = vmatpush1.bf16.msra.mxu0 %v647
          %692 = vmatprep.subr.bf16.mxu0 0
          %693 = vmatpush1.bf16.msra.mxu0 %v648
          %694 = vmatprep.subr.bf16.mxu0 0
          %695 = vmatpush1.bf16.msra.mxu0 %v649
          %696 = vmatprep.subr.bf16.mxu0 0
          %697 = vmatpush1.bf16.msra.mxu0 %v650
          %698 = vmatprep.subr.bf16.mxu0 0
          %699 = vmatpush1.bf16.msra.mxu0 %v651
          %700 = vmatprep.mubr.bf16.mxu0 %v541
          %701 = vmatmul.mubr.bf16.gmra.mrb[0].mxu0 %v540
          %v702 = vpop.f32.mrb[0].mxu0
          %v703 = vadd.f32 0.0, %v702
          %v704 = vpop.f32.mrb[0].mxu0
          %v705 = vpop.f32.mrb[0].mxu0
          %v706 = vadd.f32 0.0, %v705
          %v707 = vpop.f32.mrb[0].mxu0
          %708 = vmatprep.mubr.bf16.mxu0 %v543
          %709 = vmatmul.mubr.bf16.gmra.mrb[0].mxu0 %v542
          %v710 = vpop.f32.mrb[0].mxu0
          %v711 = vadd.f32 0.0, %v710
          %v712 = vpop.f32.mrb[0].mxu0
          %v713 = vpop.f32.mrb[0].mxu0
          %v714 = vadd.f32 0.0, %v713
          %v715 = vpop.f32.mrb[0].mxu0
          %716 = vmatprep.mubr.bf16.mxu0 %v545
          %717 = vmatmul.mubr.bf16.gmra.mrb[0].mxu0 %v544
          %v718 = vpop.f32.mrb[0].mxu0
          %v719 = vadd.f32 0.0, %v718
          %v720 = vpop.f32.mrb[0].mxu0
          %v721 = vpop.f32.mrb[0].mxu0
          %v722 = vadd.f32 0.0, %v721
          %v723 = vpop.f32.mrb[0].mxu0
          %724 = vmatprep.mubr.bf16.mxu0 %v547
          %725 = vmatmul.mubr.bf16.gmra.mrb[0].mxu0 %v546
          %v726 = vpop.f32.mrb[0].mxu0
          %v727 = vadd.f32 0.0, %v726
          %v728 = vpop.f32.mrb[0].mxu0
          %v729 = vpop.f32.mrb[0].mxu0
          %v730 = vadd.f32 0.0, %v729
          %v731 = vpop.f32.mrb[0].mxu0
          %732 = vmatprep.mubr.bf16.mxu0 %v549
          %733 = vmatmul.mubr.bf16.gmra.mrb[0].mxu0 %v548
          %v734 = vpop.f32.mrb[0].mxu0
          %v735 = vadd.f32 0.0, %v734
          %v736 = vpop.f32.mrb[0].mxu0
          %v737 = vpop.f32.mrb[0].mxu0
          %v738 = vadd.f32 0.0, %v737
          %v739 = vpop.f32.mrb[0].mxu0
          %740 = vmatprep.mubr.bf16.mxu0 %v551
          %741 = vmatmul.mubr.bf16.gmra.mrb[0].mxu0 %v550
          %v742 = vpop.f32.mrb[0].mxu0
          %v743 = vadd.f32 0.0, %v742
          %v744 = vpop.f32.mrb[0].mxu0
          %v745 = vpop.f32.mrb[0].mxu0
          %v746 = vadd.f32 0.0, %v745
          %v747 = vpop.f32.mrb[0].mxu0
          %748 = vmatprep.mubr.bf16.mxu0 %v553
          %749 = vmatmul.mubr.bf16.gmra.mrb[0].mxu0 %v552
          %v750 = vpop.f32.mrb[0].mxu0
          %v751 = vadd.f32 0.0, %v750
          %v752 = vpop.f32.mrb[0].mxu0
          %v753 = vpop.f32.mrb[0].mxu0
          %v754 = vadd.f32 0.0, %v753
          %v755 = vpop.f32.mrb[0].mxu0
          %756 = vmatprep.mubr.bf16.mxu0 %v555
          %757 = vmatmul.mubr.bf16.gmra.mrb[0].mxu0 %v554
          %v758 = vpop.f32.mrb[0].mxu0
          %v759 = vadd.f32 0.0, %v758
          %v760 = vpop.f32.mrb[0].mxu0
          %v761 = vpop.f32.mrb[0].mxu0
          %v762 = vadd.f32 0.0, %v761
          %v763 = vpop.f32.mrb[0].mxu0
          %764 = vdwg.mxu0
          %v765 = vadd.f32 %v460, %v703
          %v766 = vadd.f32 %v461, %v706
          %v767 = vadd.f32 %v462, %v711
          %v768 = vadd.f32 %v463, %v714
          %v769 = vadd.f32 %v464, %v719
          %v770 = vadd.f32 %v465, %v722
          %v771 = vadd.f32 %v466, %v727
          %v772 = vadd.f32 %v467, %v730
          %v773 = vadd.f32 %v468, %v735
          %v774 = vadd.f32 %v469, %v738
          %v775 = vadd.f32 %v470, %v743
          %v776 = vadd.f32 %v471, %v746
          %v777 = vadd.f32 %v472, %v751
          %v778 = vadd.f32 %v473, %v754
          %v779 = vadd.f32 %v474, %v759
          %v780 = vadd.f32 %v475, %v762
          %781 = vst [vmem:[#allocation2] sm:$0xff] %v765
          %782 = vst [vmem:[#allocation2 + $0x8] sm:$0xff] %v766
          %783 = vst [vmem:[#allocation2 + $0x10] sm:$0xff] %v767
          %784 = vst [vmem:[#allocation2 + $0x18] sm:$0xff] %v768
          %785 = vst [vmem:[#allocation2 + $0x20] sm:$0xff] %v769
          %786 = vst [vmem:[#allocation2 + $0x28] sm:$0xff] %v770
          %787 = vst [vmem:[#allocation2 + $0x30] sm:$0xff] %v771
          %788 = vst [vmem:[#allocation2 + $0x38] sm:$0xff] %v772
          %789 = vst [vmem:[#allocation2 + $0x40] sm:$0xff] %v773
          %790 = vst [vmem:[#allocation2 + $0x48] sm:$0xff] %v774
          %791 = vst [vmem:[#allocation2 + $0x50] sm:$0xff] %v775
          %792 = vst [vmem:[#allocation2 + $0x58] sm:$0xff] %v776
          %793 = vst [vmem:[#allocation2 + $0x60] sm:$0xff] %v777
          %794 = vst [vmem:[#allocation2 + $0x68] sm:$0xff] %v778
          %795 = vst [vmem:[#allocation2 + $0x70] sm:$0xff] %v779
          %796 = vst [vmem:[#allocation2 + $0x78] sm:$0xff] %v780
        $region72: #{tpu_custom_call.1} parent=43 // pred_fallthru
          _
        %p797 = scmp.eq.s32.totalorder %s40, 1
        // Predicated region
        $region73: #{tpu_custom_call.1} parent=43 // pred_check
          %p798 = pneg %p797
        $region74: #{tpu_custom_call.1} parent=43 // pred_check_branch
          %800 = sbr.rel (%p798) target = $region76
        $region75: #{tpu_custom_call.1} parent=43 // pred_region
          %v801 = vld [vmem:[#allocation2] sm:$0xff]
          %v802 = vld [vmem:[#allocation2 + $0x8] sm:$0xff]
          %v803 = vld [vmem:[#allocation2 + $0x10] sm:$0xff]
          %v804 = vld [vmem:[#allocation2 + $0x18] sm:$0xff]
          %v805 = vld [vmem:[#allocation2 + $0x20] sm:$0xff]
          %v806 = vld [vmem:[#allocation2 + $0x28] sm:$0xff]
          %v807 = vld [vmem:[#allocation2 + $0x30] sm:$0xff]
          %v808 = vld [vmem:[#allocation2 + $0x38] sm:$0xff]
          %v809 = vld [vmem:[#allocation2 + $0x40] sm:$0xff]
          %v810 = vld [vmem:[#allocation2 + $0x48] sm:$0xff]
          %v811 = vld [vmem:[#allocation2 + $0x50] sm:$0xff]
          %v812 = vld [vmem:[#allocation2 + $0x58] sm:$0xff]
          %v813 = vld [vmem:[#allocation2 + $0x60] sm:$0xff]
          %v814 = vld [vmem:[#allocation2 + $0x68] sm:$0xff]
          %v815 = vld [vmem:[#allocation2 + $0x70] sm:$0xff]
          %v816 = vld [vmem:[#allocation2 + $0x78] sm:$0xff]
          %v817 = vpack.c.bf16 %v802, %v801
          %v818 = vpack.c.bf16 %v804, %v803
          %v819 = vpack.c.bf16 %v806, %v805
          %v820 = vpack.c.bf16 %v808, %v807
          %v821 = vpack.c.bf16 %v810, %v809
          %v822 = vpack.c.bf16 %v812, %v811
          %v823 = vpack.c.bf16 %v814, %v813
          %v824 = vpack.c.bf16 %v816, %v815
          %v825 = vld [vmem:[%s345] sm:$0xf]
          %v826 = vld [vmem:[%s345 + $0x4] sm:$0xf]
          %v827 = vld [vmem:[%s345 + $0x8] sm:$0xf]
          %v828 = vld [vmem:[%s345 + $0xc] sm:$0xf]
          %v829 = vld [vmem:[%s345 + $0x10] sm:$0xf]
          %v830 = vld [vmem:[%s345 + $0x14] sm:$0xf]
          %v831 = vld [vmem:[%s345 + $0x18] sm:$0xf]
          %v832 = vld [vmem:[%s345 + $0x1c] sm:$0xf]
          %v833 = vld [vmem:[%s345 + $0x20] sm:$0xf]
          %v834 = vld [vmem:[%s345 + $0x24] sm:$0xf]
          %v835 = vld [vmem:[%s345 + $0x28] sm:$0xf]
          %v836 = vld [vmem:[%s345 + $0x2c] sm:$0xf]
          %v837 = vld [vmem:[%s345 + $0x30] sm:$0xf]
          %v838 = vld [vmem:[%s345 + $0x34] sm:$0xf]
          %v839 = vld [vmem:[%s345 + $0x38] sm:$0xf]
          %v840 = vld [vmem:[%s345 + $0x3c] sm:$0xf]
          %v841 = vld [vmem:[#allocation12] sm:$0xf]
          %v842 = vld [vmem:[#allocation12 + $0x4] sm:$0xf]
          %v843 = vld [vmem:[#allocation12 + $0x8] sm:$0xf]
          %v844 = vld [vmem:[#allocation12 + $0xc] sm:$0xf]
          %v845 = vld [vmem:[#allocation12 + $0x10] sm:$0xf]
          %v846 = vld [vmem:[#allocation12 + $0x14] sm:$0xf]
          %v847 = vld [vmem:[#allocation12 + $0x18] sm:$0xf]
          %v848 = vld [vmem:[#allocation12 + $0x1c] sm:$0xf]
          %v849 = vld [vmem:[#allocation12 + $0x20] sm:$0xf]
          %v850 = vld [vmem:[#allocation12 + $0x24] sm:$0xf]
          %v851 = vld [vmem:[#allocation12 + $0x28] sm:$0xf]
          %v852 = vld [vmem:[#allocation12 + $0x2c] sm:$0xf]
          %v853 = vld [vmem:[#allocation12 + $0x30] sm:$0xf]
          %v854 = vld [vmem:[#allocation12 + $0x34] sm:$0xf]
          %v855 = vld [vmem:[#allocation12 + $0x38] sm:$0xf]
          %v856 = vld [vmem:[#allocation12 + $0x3c] sm:$0xf]
          %v857 = vld [vmem:[#allocation13] sm:$0xf]
          %v858 = vld [vmem:[#allocation13 + $0x4] sm:$0xf]
          %v859 = vld [vmem:[#allocation13 + $0x8] sm:$0xf]
          %v860 = vld [vmem:[#allocation13 + $0xc] sm:$0xf]
          %v861 = vld [vmem:[#allocation13 + $0x10] sm:$0xf]
          %v862 = vld [vmem:[#allocation13 + $0x14] sm:$0xf]
          %v863 = vld [vmem:[#allocation13 + $0x18] sm:$0xf]
          %v864 = vld [vmem:[#allocation13 + $0x1c] sm:$0xf]
          %v865 = vld [vmem:[#allocation13 + $0x20] sm:$0xf]
          %v866 = vld [vmem:[#allocation13 + $0x24] sm:$0xf]
          %v867 = vld [vmem:[#allocation13 + $0x28] sm:$0xf]
          %v868 = vld [vmem:[#allocation13 + $0x2c] sm:$0xf]
          %v869 = vld [vmem:[#allocation13 + $0x30] sm:$0xf]
          %v870 = vld [vmem:[#allocation13 + $0x34] sm:$0xf]
          %v871 = vld [vmem:[#allocation13 + $0x38] sm:$0xf]
          %v872 = vld [vmem:[#allocation13 + $0x3c] sm:$0xf]
          %v889 = vunpack.c.l.b16 %v857
          %v890 = vunpack.c.l.b16 %v858
          %v891 = vunpack.c.l.b16 %v859
          %v892 = vunpack.c.l.b16 %v860
          %v893 = vunpack.c.l.b16 %v861
          %v894 = vunpack.c.l.b16 %v862
          %v895 = vunpack.c.l.b16 %v863
          %v896 = vunpack.c.l.b16 %v864
          %v897 = vunpack.c.l.b16 %v865
          %v898 = vunpack.c.l.b16 %v866
          %v899 = vunpack.c.l.b16 %v867
          %v900 = vunpack.c.l.b16 %v868
          %v901 = vunpack.c.l.b16 %v869
          %v902 = vunpack.c.l.b16 %v870
          %v903 = vunpack.c.l.b16 %v871
          %v904 = vunpack.c.l.b16 %v872
          %v905 = vpack.c.b16 %v890, %v889
          %v906 = vpack.c.b16 %v892, %v891
          %v907 = vpack.c.b16 %v894, %v893
          %v908 = vpack.c.b16 %v896, %v895
          %v909 = vpack.c.b16 %v898, %v897
          %v910 = vpack.c.b16 %v900, %v899
          %v911 = vpack.c.b16 %v902, %v901
          %v912 = vpack.c.b16 %v904, %v903
          %921 = vmatprep.subr.bf16.mxu0 0
          %922 = vmatpush1.bf16.msra.mxu0 %v905
          %923 = vmatprep.subr.bf16.mxu0 0
          %924 = vmatpush1.bf16.msra.mxu0 %v906
          %925 = vmatprep.subr.bf16.mxu0 0
          %926 = vmatpush1.bf16.msra.mxu0 %v907
          %927 = vmatprep.subr.bf16.mxu0 0
          %928 = vmatpush1.bf16.msra.mxu0 %v908
          %929 = vmatprep.subr.bf16.mxu0 0
          %930 = vmatpush1.bf16.msra.mxu0 %v909
          %931 = vmatprep.subr.bf16.mxu0 0
          %932 = vmatpush1.bf16.msra.mxu0 %v910
          %933 = vmatprep.subr.bf16.mxu0 0
          %934 = vmatpush1.bf16.msra.mxu0 %v911
          %935 = vmatprep.subr.bf16.mxu0 0
          %936 = vmatpush1.bf16.msra.mxu0 %v912
          %937 = vmatprep.subr.bf16.mxu0 0
          %938 = vmatpush1.bf16.msra.mxu0 0
          %939 = vmatprep.subr.bf16.mxu0 0
          %940 = vmatpush1.bf16.msra.mxu0 0
          %941 = vmatprep.subr.bf16.mxu0 0
          %942 = vmatpush1.bf16.msra.mxu0 0
          %943 = vmatprep.subr.bf16.mxu0 0
          %944 = vmatpush1.bf16.msra.mxu0 0
          %945 = vmatprep.subr.bf16.mxu0 0
          %946 = vmatpush1.bf16.msra.mxu0 0
          %947 = vmatprep.subr.bf16.mxu0 0
          %948 = vmatpush1.bf16.msra.mxu0 0
          %949 = vmatprep.subr.bf16.mxu0 0
          %950 = vmatpush1.bf16.msra.mxu0 0
          %951 = vmatprep.subr.bf16.mxu0 0
          %952 = vmatpush1.bf16.msra.mxu0 0
          %953 = vmatprep.mubr.bf16.mxu0 0
          %954 = vmatmul.mubr.bf16.gmra.mrb[0].mxu0 %v817
          %v955 = vpop.f32.mrb[0].mxu0
          %v956 = vadd.f32 0.0, %v955
          %v957 = vpop.f32.mrb[0].mxu0
          %v958 = vpop.f32.mrb[0].mxu0
          %v959 = vadd.f32 0.0, %v958
          %v960 = vpop.f32.mrb[0].mxu0
          %961 = vmatprep.mubr.bf16.mxu0 0
          %962 = vmatmul.mubr.bf16.gmra.mrb[0].mxu0 %v818
          %v963 = vpop.f32.mrb[0].mxu0
          %v964 = vadd.f32 0.0, %v963
          %v965 = vpop.f32.mrb[0].mxu0
          %v966 = vpop.f32.mrb[0].mxu0
          %v967 = vadd.f32 0.0, %v966
          %v968 = vpop.f32.mrb[0].mxu0
          %969 = vmatprep.mubr.bf16.mxu0 0
          %970 = vmatmul.mubr.bf16.gmra.mrb[0].mxu0 %v819
          %v971 = vpop.f32.mrb[0].mxu0
          %v972 = vadd.f32 0.0, %v971
          %v973 = vpop.f32.mrb[0].mxu0
          %v974 = vpop.f32.mrb[0].mxu0
          %v975 = vadd.f32 0.0, %v974
          %v976 = vpop.f32.mrb[0].mxu0
          %977 = vmatprep.mubr.bf16.mxu0 0
          %978 = vmatmul.mubr.bf16.gmra.mrb[0].mxu0 %v820
          %v979 = vpop.f32.mrb[0].mxu0
          %v980 = vadd.f32 0.0, %v979
          %v981 = vpop.f32.mrb[0].mxu0
          %v982 = vpop.f32.mrb[0].mxu0
          %v983 = vadd.f32 0.0, %v982
          %v984 = vpop.f32.mrb[0].mxu0
          %985 = vmatprep.mubr.bf16.mxu0 0
          %986 = vmatmul.mubr.bf16.gmra.mrb[0].mxu0 %v821
          %v987 = vpop.f32.mrb[0].mxu0
          %v988 = vadd.f32 0.0, %v987
          %v989 = vpop.f32.mrb[0].mxu0
          %v990 = vpop.f32.mrb[0].mxu0
          %v991 = vadd.f32 0.0, %v990
          %v992 = vpop.f32.mrb[0].mxu0
          %993 = vmatprep.mubr.bf16.mxu0 0
          %994 = vmatmul.mubr.bf16.gmra.mrb[0].mxu0 %v822
          %v995 = vpop.f32.mrb[0].mxu0
          %v996 = vadd.f32 0.0, %v995
          %v997 = vpop.f32.mrb[0].mxu0
          %v998 = vpop.f32.mrb[0].mxu0
          %v999 = vadd.f32 0.0, %v998
          %v1000 = vpop.f32.mrb[0].mxu0
          %1001 = vmatprep.mubr.bf16.mxu0 0
          %1002 = vmatmul.mubr.bf16.gmra.mrb[0].mxu0 %v823
          %v1003 = vpop.f32.mrb[0].mxu0
          %v1004 = vadd.f32 0.0, %v1003
          %v1005 = vpop.f32.mrb[0].mxu0
          %v1006 = vpop.f32.mrb[0].mxu0
          %v1007 = vadd.f32 0.0, %v1006
          %v1008 = vpop.f32.mrb[0].mxu0
          %1009 = vmatprep.mubr.bf16.mxu0 0
          %1010 = vmatmul.mubr.bf16.gmra.mrb[0].mxu0 %v824
          %v1011 = vpop.f32.mrb[0].mxu0
          %v1012 = vadd.f32 0.0, %v1011
          %v1013 = vpop.f32.mrb[0].mxu0
          %v1014 = vpop.f32.mrb[0].mxu0
          %v1015 = vadd.f32 0.0, %v1014
          %v1016 = vpop.f32.mrb[0].mxu0
          %1017 = vdwg.mxu0
          %v1034 = vunpack.c.l.b16 %v825
          %v1035 = vunpack.c.l.b16 %v826
          %v1036 = vunpack.c.l.b16 %v827
          %v1037 = vunpack.c.l.b16 %v828
          %v1038 = vunpack.c.l.b16 %v829
          %v1039 = vunpack.c.l.b16 %v830
          %v1040 = vunpack.c.l.b16 %v831
          %v1041 = vunpack.c.l.b16 %v832
          %v1042 = vunpack.c.l.b16 %v833
          %v1043 = vunpack.c.l.b16 %v834
          %v1044 = vunpack.c.l.b16 %v835
          %v1045 = vunpack.c.l.b16 %v836
          %v1046 = vunpack.c.l.b16 %v837
          %v1047 = vunpack.c.l.b16 %v838
          %v1048 = vunpack.c.l.b16 %v839
          %v1049 = vunpack.c.l.b16 %v840
          %v1050 = vpack.c.b16 %v1035, %v1034
          %v1051 = vpack.c.b16 %v1037, %v1036
          %v1052 = vpack.c.b16 %v1039, %v1038
          %v1053 = vpack.c.b16 %v1041, %v1040
          %v1054 = vpack.c.b16 %v1043, %v1042
          %v1055 = vpack.c.b16 %v1045, %v1044
          %v1056 = vpack.c.b16 %v1047, %v1046
          %v1057 = vpack.c.b16 %v1049, %v1048
          %v1082 = vunpack.c.l.b16 %v841
          %v1083 = vunpack.c.l.b16 %v842
          %v1084 = vunpack.c.l.b16 %v843
          %v1085 = vunpack.c.l.b16 %v844
          %v1086 = vunpack.c.l.b16 %v845
          %v1087 = vunpack.c.l.b16 %v846
          %v1088 = vunpack.c.l.b16 %v847
          %v1089 = vunpack.c.l.b16 %v848
          %v1090 = vunpack.c.l.b16 %v849
          %v1091 = vunpack.c.l.b16 %v850
          %v1092 = vunpack.c.l.b16 %v851
          %v1093 = vunpack.c.l.b16 %v852
          %v1094 = vunpack.c.l.b16 %v853
          %v1095 = vunpack.c.l.b16 %v854
          %v1096 = vunpack.c.l.b16 %v855
          %v1097 = vunpack.c.l.b16 %v856
          %v1098 = vpack.c.b16 %v1083, %v1082
          %v1099 = vpack.c.b16 %v1085, %v1084
          %v1100 = vpack.c.b16 %v1087, %v1086
          %v1101 = vpack.c.b16 %v1089, %v1088
          %v1102 = vpack.c.b16 %v1091, %v1090
          %v1103 = vpack.c.b16 %v1093, %v1092
          %v1104 = vpack.c.b16 %v1095, %v1094
          %v1105 = vpack.c.b16 %v1097, %v1096
          %1114 = vmatprep.subr.bf16.mxu0 0
          %1115 = vmatpush1.bf16.msra.mxu0 %v1098
          %1116 = vmatprep.subr.bf16.mxu0 0
          %1117 = vmatpush1.bf16.msra.mxu0 %v1099
          %1118 = vmatprep.subr.bf16.mxu0 0
          %1119 = vmatpush1.bf16.msra.mxu0 %v1100
          %1120 = vmatprep.subr.bf16.mxu0 0
          %1121 = vmatpush1.bf16.msra.mxu0 %v1101
          %1122 = vmatprep.subr.bf16.mxu0 0
          %1123 = vmatpush1.bf16.msra.mxu0 %v1102
          %1124 = vmatprep.subr.bf16.mxu0 0
          %1125 = vmatpush1.bf16.msra.mxu0 %v1103
          %1126 = vmatprep.subr.bf16.mxu0 0
          %1127 = vmatpush1.bf16.msra.mxu0 %v1104
          %1128 = vmatprep.subr.bf16.mxu0 0
          %1129 = vmatpush1.bf16.msra.mxu0 %v1105
          %1130 = vmatprep.subr.bf16.mxu0 0
          %1131 = vmatpush1.bf16.msra.mxu0 0
          %1132 = vmatprep.subr.bf16.mxu0 0
          %1133 = vmatpush1.bf16.msra.mxu0 0
          %1134 = vmatprep.subr.bf16.mxu0 0
          %1135 = vmatpush1.bf16.msra.mxu0 0
          %1136 = vmatprep.subr.bf16.mxu0 0
          %1137 = vmatpush1.bf16.msra.mxu0 0
          %1138 = vmatprep.subr.bf16.mxu0 0
          %1139 = vmatpush1.bf16.msra.mxu0 0
          %1140 = vmatprep.subr.bf16.mxu0 0
          %1141 = vmatpush1.bf16.msra.mxu0 0
          %1142 = vmatprep.subr.bf16.mxu0 0
          %1143 = vmatpush1.bf16.msra.mxu0 0
          %1144 = vmatprep.subr.bf16.mxu0 0
          %1145 = vmatpush1.bf16.msra.mxu0 0
          %1146 = vmatprep.mubr.bf16.mxu0 0
          %1147 = vmatmul.mubr.bf16.gmra.mrb[0].mxu0 %v1050
          %v1148 = vpop.f32.mrb[0].mxu0
          %v1149 = vadd.f32 %v956, %v1148
          %v1150 = vpop.f32.mrb[0].mxu0
          %v1151 = vpop.f32.mrb[0].mxu0
          %v1152 = vadd.f32 %v959, %v1151
          %v1153 = vpop.f32.mrb[0].mxu0
          %1154 = vmatprep.mubr.bf16.mxu0 0
          %1155 = vmatmul.mubr.bf16.gmra.mrb[0].mxu0 %v1051
          %v1156 = vpop.f32.mrb[0].mxu0
          %v1157 = vadd.f32 %v964, %v1156
          %v1158 = vpop.f32.mrb[0].mxu0
          %v1159 = vpop.f32.mrb[0].mxu0
          %v1160 = vadd.f32 %v967, %v1159
          %v1161 = vpop.f32.mrb[0].mxu0
          %1162 = vmatprep.mubr.bf16.mxu0 0
          %1163 = vmatmul.mubr.bf16.gmra.mrb[0].mxu0 %v1052
          %v1164 = vpop.f32.mrb[0].mxu0
          %v1165 = vadd.f32 %v972, %v1164
          %v1166 = vpop.f32.mrb[0].mxu0
          %v1167 = vpop.f32.mrb[0].mxu0
          %v1168 = vadd.f32 %v975, %v1167
          %v1169 = vpop.f32.mrb[0].mxu0
          %1170 = vmatprep.mubr.bf16.mxu0 0
          %1171 = vmatmul.mubr.bf16.gmra.mrb[0].mxu0 %v1053
          %v1172 = vpop.f32.mrb[0].mxu0
          %v1173 = vadd.f32 %v980, %v1172
          %v1174 = vpop.f32.mrb[0].mxu0
          %v1175 = vpop.f32.mrb[0].mxu0
          %v1176 = vadd.f32 %v983, %v1175
          %v1177 = vpop.f32.mrb[0].mxu0
          %1178 = vmatprep.mubr.bf16.mxu0 0
          %1179 = vmatmul.mubr.bf16.gmra.mrb[0].mxu0 %v1054
          %v1180 = vpop.f32.mrb[0].mxu0
          %v1181 = vadd.f32 %v988, %v1180
          %v1182 = vpop.f32.mrb[0].mxu0
          %v1183 = vpop.f32.mrb[0].mxu0
          %v1184 = vadd.f32 %v991, %v1183
          %v1185 = vpop.f32.mrb[0].mxu0
          %1186 = vmatprep.mubr.bf16.mxu0 0
          %1187 = vmatmul.mubr.bf16.gmra.mrb[0].mxu0 %v1055
          %v1188 = vpop.f32.mrb[0].mxu0
          %v1189 = vadd.f32 %v996, %v1188
          %v1190 = vpop.f32.mrb[0].mxu0
          %v1191 = vpop.f32.mrb[0].mxu0
          %v1192 = vadd.f32 %v999, %v1191
          %v1193 = vpop.f32.mrb[0].mxu0
          %1194 = vmatprep.mubr.bf16.mxu0 0
          %1195 = vmatmul.mubr.bf16.gmra.mrb[0].mxu0 %v1056
          %v1196 = vpop.f32.mrb[0].mxu0
          %v1197 = vadd.f32 %v1004, %v1196
          %v1198 = vpop.f32.mrb[0].mxu0
          %v1199 = vpop.f32.mrb[0].mxu0
          %v1200 = vadd.f32 %v1007, %v1199
          %v1201 = vpop.f32.mrb[0].mxu0
          %1202 = vmatprep.mubr.bf16.mxu0 0
          %1203 = vmatmul.mubr.bf16.gmra.mrb[0].mxu0 %v1057
          %v1204 = vpop.f32.mrb[0].mxu0
          %v1205 = vadd.f32 %v1012, %v1204
          %v1206 = vpop.f32.mrb[0].mxu0
          %v1207 = vpop.f32.mrb[0].mxu0
          %v1208 = vadd.f32 %v1015, %v1207
          %v1209 = vpop.f32.mrb[0].mxu0
          %1210 = vdwg.mxu0
          %v1211 = vld [vmem:[%s7] sm:$0x1]
          %v1213 = vlaneseq
          %v1214 = vshrl.u32 %v1213, 7
          %v1215 = vsub.s32 0, %v1214
          %v1216 = vrot.slane %v1211, %v1215
          %v1218 = vadd.f32 %v1149, %v1216
          %v1219 = vadd.f32 %v1152, %v1216
          %v1220 = vadd.f32 %v1157, %v1216
          %v1221 = vadd.f32 %v1160, %v1216
          %v1222 = vadd.f32 %v1165, %v1216
          %v1223 = vadd.f32 %v1168, %v1216
          %v1224 = vadd.f32 %v1173, %v1216
          %v1225 = vadd.f32 %v1176, %v1216
          %v1226 = vadd.f32 %v1181, %v1216
          %v1227 = vadd.f32 %v1184, %v1216
          %v1228 = vadd.f32 %v1189, %v1216
          %v1229 = vadd.f32 %v1192, %v1216
          %v1230 = vadd.f32 %v1197, %v1216
          %v1231 = vadd.f32 %v1200, %v1216
          %v1232 = vadd.f32 %v1205, %v1216
          %v1233 = vadd.f32 %v1208, %v1216
          %v1234 = vmax.f32 %v1218, 0.0
          %v1235 = vmax.f32 %v1219, 0.0
          %v1236 = vmax.f32 %v1220, 0.0
          %v1237 = vmax.f32 %v1221, 0.0
          %v1238 = vmax.f32 %v1222, 0.0
          %v1239 = vmax.f32 %v1223, 0.0
          %v1240 = vmax.f32 %v1224, 0.0
          %v1241 = vmax.f32 %v1225, 0.0
          %v1242 = vmax.f32 %v1226, 0.0
          %v1243 = vmax.f32 %v1227, 0.0
          %v1244 = vmax.f32 %v1228, 0.0
          %v1245 = vmax.f32 %v1229, 0.0
          %v1246 = vmax.f32 %v1230, 0.0
          %v1247 = vmax.f32 %v1231, 0.0
          %v1248 = vmax.f32 %v1232, 0.0
          %v1249 = vmax.f32 %v1233, 0.0
          %v1250 = vpack.c.bf16 %v1235, %v1234
          %v1251 = vpack.c.bf16 %v1237, %v1236
          %v1252 = vpack.c.bf16 %v1239, %v1238
          %v1253 = vpack.c.bf16 %v1241, %v1240
          %v1254 = vpack.c.bf16 %v1243, %v1242
          %v1255 = vpack.c.bf16 %v1245, %v1244
          %v1256 = vpack.c.bf16 %v1247, %v1246
          %v1257 = vpack.c.bf16 %v1249, %v1248
          %v1266 = vunpack.c.l.b16 %v1250
          %v1267 = vunpack.c.h.b16 %v1250
          %v1268 = vunpack.c.l.b16 %v1251
          %v1269 = vunpack.c.h.b16 %v1251
          %v1270 = vunpack.c.l.b16 %v1252
          %v1271 = vunpack.c.h.b16 %v1252
          %v1272 = vunpack.c.l.b16 %v1253
          %v1273 = vunpack.c.h.b16 %v1253
          %v1274 = vunpack.c.l.b16 %v1254
          %v1275 = vunpack.c.h.b16 %v1254
          %v1276 = vunpack.c.l.b16 %v1255
          %v1277 = vunpack.c.h.b16 %v1255
          %v1278 = vunpack.c.l.b16 %v1256
          %v1279 = vunpack.c.h.b16 %v1256
          %v1280 = vunpack.c.l.b16 %v1257
          %v1281 = vunpack.c.h.b16 %v1257
          %v1282 = vpack.c.b16 %v1266, %v1266
          %v1283 = vpack.c.b16 %v1267, %v1267
          %v1284 = vpack.c.b16 %v1268, %v1268
          %v1285 = vpack.c.b16 %v1269, %v1269
          %v1286 = vpack.c.b16 %v1270, %v1270
          %v1287 = vpack.c.b16 %v1271, %v1271
          %v1288 = vpack.c.b16 %v1272, %v1272
          %v1289 = vpack.c.b16 %v1273, %v1273
          %v1290 = vpack.c.b16 %v1274, %v1274
          %v1291 = vpack.c.b16 %v1275, %v1275
          %v1292 = vpack.c.b16 %v1276, %v1276
          %v1293 = vpack.c.b16 %v1277, %v1277
          %v1294 = vpack.c.b16 %v1278, %v1278
          %v1295 = vpack.c.b16 %v1279, %v1279
          %v1296 = vpack.c.b16 %v1280, %v1280
          %v1297 = vpack.c.b16 %v1281, %v1281
          %1314 = vst [vmem:[%s386] sm:$0xf] %v1282
          %1315 = vst [vmem:[%s386 + $0x4] sm:$0xf] %v1283
          %1316 = vst [vmem:[%s386 + $0x8] sm:$0xf] %v1284
          %1317 = vst [vmem:[%s386 + $0xc] sm:$0xf] %v1285
          %1318 = vst [vmem:[%s386 + $0x10] sm:$0xf] %v1286
          %1319 = vst [vmem:[%s386 + $0x14] sm:$0xf] %v1287
          %1320 = vst [vmem:[%s386 + $0x18] sm:$0xf] %v1288
          %1321 = vst [vmem:[%s386 + $0x1c] sm:$0xf] %v1289
          %1322 = vst [vmem:[%s386 + $0x20] sm:$0xf] %v1290
          %1323 = vst [vmem:[%s386 + $0x24] sm:$0xf] %v1291
          %1324 = vst [vmem:[%s386 + $0x28] sm:$0xf] %v1292
          %1325 = vst [vmem:[%s386 + $0x2c] sm:$0xf] %v1293
          %1326 = vst [vmem:[%s386 + $0x30] sm:$0xf] %v1294
          %1327 = vst [vmem:[%s386 + $0x34] sm:$0xf] %v1295
          %1328 = vst [vmem:[%s386 + $0x38] sm:$0xf] %v1296
          %1329 = vst [vmem:[%s386 + $0x3c] sm:$0xf] %v1297
        $region76: #{tpu_custom_call.1} parent=43 // pred_fallthru
          _
        %s1330 = sand.u32 %s199, 1
        %s1331 = scalar_lea.sflag [#allocation8], %s1330
        %s1332 = sand.u32 %s199, 1
        %s1333 = smul.addr %s1332, 64
        %s1334 = scalar_lea.vmem [#allocation15], %s1333
        // Predicated region
        $region77: #{tpu_custom_call.1} parent=43 // pred_check
          %p1335 = pneg %p209
        $region78: #{tpu_custom_call.1} parent=43 // pred_check_branch
          %1337 = sbr.rel (%p1335) target = $region80
        $region79: #{tpu_custom_call.1} parent=43 // pred_region
          %s1338 = smul.u32 16, %s39
          %s1340 = ssub.s32 1024, 1024
          %1341 = vsyncadd %s1331, %s1340
          %s1342 = smul.addr %s1338, 64
          %s1343 = scalar_lea.hbm %s8, %s1342
          %s1344 = sshll.u32 %s1334, 4
          %s1345 = int_to_ptr.vmem [resolvable:$true] %s1344
          %1350 = dma.vmem_to_hbm [thread:$0]  %s1345, 1024, %s1343, %s1331, 64, 64, 4
        $region80: #{tpu_custom_call.1} parent=43 // pred_fallthru
          _
      $region44: #{tpu_custom_call.1} parent=5 // pred_fallthru
        _
      %p1351 = scmp.le.s32.totalorder 2, %s30
      // Predicated region
      $region81: #{tpu_custom_call.1} parent=5 // pred_check
        %p1352 = pneg %p1351
      $region82: #{tpu_custom_call.1} parent=5 // pred_check_branch
        %1354 = sbr.rel (%p1352) target = $region84
      $region83: #{tpu_custom_call.1} parent=5 // pred_region
        %s1355 = ssub.s32 %s30, 2
        // Predicated region
        $region85: #{tpu_custom_call.1} parent=83 // pred_check
          %p1356 = pneg %p215
        $region86: #{tpu_custom_call.1} parent=83 // pred_check_branch
          %1358 = sbr.rel (%p1356) target = $region88
        $region87: #{tpu_custom_call.1} parent=83 // pred_region
          %s1359 = sand.u32 %s200, 1
          %s1360 = scalar_lea.sflag [#allocation8], %s1359
          %s1361 = sand.u32 %s200, 1
          %s1362 = smul.addr %s1361, 64
          %s1363 = scalar_lea.vmem [#allocation15], %s1362
          %1364 = dma.done %s1360, 1024
        $region88: #{tpu_custom_call.1} parent=83 // pred_fallthru
          _
      $region84: #{tpu_custom_call.1} parent=5 // pred_fallthru
        _
    $region6: #{tpu_custom_call.1} parent=1 // loop_footer
      %s34 = sadd.s32 1, %s30
    $region7: #{tpu_custom_call.1} parent=1 // loop_footer_branch
      %29 = sbr.rel target = $region3
    $region8: #{tpu_custom_call.1} parent=1 // loop_exit
      _
    %1365 = vsyncpa [#allocation7], 1
    %s1366 = scalar_lea.sflag [#allocation7], 1
    %1367 = vsyncpa %s1366, 1
    %1368 = vsyncpa [#allocation10], 1
    %1369 = vsyncpa [#allocation14], 1
    %1370 = vsyncpa [#allocation8], 1
    %s1371 = scalar_lea.sflag [#allocation8], 1
    %1372 = vsyncpa %s1371, 1

</llo_original>
